<compile_context>
chip_gen: v5e
topology: v5e:2x2
jax: 0.10.0
libtpu: 0.0.40
codegen_flags: <defaults>
</compile_context>

<pallas_src>
import functools

import jax
import jax.numpy as jnp
from jax.experimental import pallas as pl
from jax.experimental.pallas import tpu as pltpu

HIDDEN = 256
LN_EPS = 1e-12


def _round_up(n, m):
    return ((n + m - 1) // m) * m


def _cdiv(a, b):
    return -(-a // b)


def _prelu(x, a):
    # PyTorch nn.PReLU() default: single learnable scalar (init 0.25).
    return jnp.maximum(x, 0.0) + a * jnp.minimum(x, 0.0)


def _layernorm(x, gamma, beta, out_dtype=jnp.float32):
    # LayerNorm over last dim, eps=1e-12, elementwise affine (biased variance).
    mean = jnp.mean(x, axis=-1, keepdims=True)
    var = jnp.mean(jnp.square(x - mean), axis=-1, keepdims=True)
    inv = jax.lax.rsqrt(var + LN_EPS)
    return ((x - mean) * inv * gamma + beta).astype(out_dtype)


# ----------------------------------------------------------------------------
# Kernel
# ----------------------------------------------------------------------------

def vae_kernel(
    # scalars (SMEM)
    a_ref,
    # batch-tiled inputs
    x_ref, eps_ref,
    # resident (constant index_map) weights / biases / affines
    w1_ref, b1_ref, g1_ref, beta1_ref,
    w_mulv_ref, b_mulv_ref,
    w3_ref, b3_ref, g2_ref, beta2_ref,
    w4_ref, b4_ref,
    # batch-tiled outputs
    recon_ref, mulv_ref,
    *, latent_size,
):
    a1 = a_ref[0]
    a2 = a_ref[1]

    # ---- encode ----
    x = x_ref[...].astype(jnp.bfloat16)                       # bf16 MXU operand
    h1 = jnp.dot(x, w1_ref[...], preferred_element_type=jnp.float32) + b1_ref[...]
    h1 = _prelu(h1, a1)
    # LayerNorm in f32; bf16 cast folded into its affine epilogue (next MXU operand).
    h1 = _layernorm(h1, g1_ref[...], beta1_ref[...], out_dtype=jnp.bfloat16)

    # fused fc21 | fc22 -> single lane-dense [tile_b, 2*latent_size] MXU result
    mulv = jnp.dot(h1, w_mulv_ref[...], preferred_element_type=jnp.float32) \
        + b_mulv_ref[...]
    mu = mulv[:, :latent_size]
    logvar = mulv[:, latent_size:]

    # ---- reparameterize ----  z = mu + eps * exp(0.5 * logvar)   (f32, EUP exp)
    z = mu + eps_ref[...] * jnp.exp(0.5 * logvar)

    # ---- decode ----
    h3 = jnp.dot(z.astype(jnp.bfloat16), w3_ref[...],
                 preferred_element_type=jnp.float32) + b3_ref[...]
    h3 = _prelu(h3, a2)
    h3 = _layernorm(h3, g2_ref[...], beta2_ref[...], out_dtype=jnp.bfloat16)
    recon = jnp.dot(h3, w4_ref[...], preferred_element_type=jnp.float32) + b4_ref[...]

    recon_ref[...] = recon.astype(recon_ref.dtype)
    mulv_ref[...] = mulv.astype(mulv_ref.dtype)


# ----------------------------------------------------------------------------
# Tiling / VMEM heuristics
# ----------------------------------------------------------------------------

def _vmem_estimate_bytes(tile_b, in_f, lat):
    # resident bf16 weights (single-buffered) + small f32 vectors
    w_bytes = 2 * (in_f * HIDDEN + HIDDEN * 2 * lat + lat * HIDDEN + HIDDEN * in_f)
    small = 4 * (4 * HIDDEN + 4 * lat + in_f)
    # double-buffered batch-tiled I/O (x, eps, recon, mu|logvar; all f32)
    io = 2 * 4 * tile_b * (2 * in_f + 3 * lat)
    # live f32 intermediates (h1, h3, z, mulv) + bf16 matmul operand copies
    inter = 4 * tile_b * (2 * HIDDEN + 3 * lat) + 2 * tile_b * (in_f + 2 * HIDDEN + lat)
    return w_bytes + small + io + inter


def _pick_tiling(batch, in_f, lat, vmem_cap):
    target = 1024                           # 512-2048 rows: near HBM roofline per tile
    n_tiles = max(1, _cdiv(batch, target))
    if batch >= 32:
        n_tiles = max(n_tiles, 2)           # >=2 tiles so v7x megacore uses both TCs
    tile_b = _round_up(_cdiv(batch, n_tiles), 16)   # 16 rows = bf16 sublane packing
    # generation-aware cap: stay well under the physical VMEM ceiling (64 MiB on v7x)
    budget = int(0.7 * vmem_cap)
    while tile_b > 16 and _vmem_estimate_bytes(tile_b, in_f, lat) > budget:
        tile_b = max(16, _round_up(tile_b // 2, 16))
    n_tiles = _cdiv(batch, tile_b)
    return tile_b, n_tiles


# ----------------------------------------------------------------------------
# pallas_call wrapper
# ----------------------------------------------------------------------------

@functools.partial(
    jax.jit,
    static_argnames=("input_size", "latent_size", "tile_b", "n_tiles",
                     "vmem_limit", "resident_buffered"))
def _vae_call(x_pad, eps_pad, packed, *, input_size, latent_size,
              tile_b, n_tiles, vmem_limit, resident_buffered):
    b_pad = tile_b * n_tiles
    lat2 = 2 * latent_size

    def tiled(cols):
        return pl.BlockSpec((tile_b, cols), lambda i: (i, 0))

    def resident(arr):
        if resident_buffered:
            # constant index_map -> fetched once; single buffer halves VMEM footprint
            return pl.BlockSpec(arr.shape, lambda i: (0, 0),
                                pipeline_mode=pl.Buffered(1))
        return pl.BlockSpec(arr.shape, lambda i: (0, 0))

    in_specs = [
        pl.BlockSpec(memory_space=pltpu.MemorySpace.SMEM),   # PReLU scalars
        tiled(input_size),                                   # x  (true width)
        tiled(latent_size),                                  # eps (true width)
        resident(packed["w1"]), resident(packed["b1"]),
        resident(packed["g1"]), resident(packed["beta1"]),
        resident(packed["w_mulv"]), resident(packed["b_mulv"]),
        resident(packed["w3"]), resident(packed["b3"]),
        resident(packed["g2"]), resident(packed["beta2"]),
        resident(packed["w4"]), resident(packed["b4"]),
    ]
    out_specs = (tiled(input_size), tiled(lat2))
    out_shapes = (
        jax.ShapeDtypeStruct((b_pad, input_size), jnp.float32),   # recon (true width)
        jax.ShapeDtypeStruct((b_pad, lat2), jnp.float32),         # fused mu|logvar
    )

    flops = 2 * b_pad * (input_size * HIDDEN + HIDDEN * lat2
                         + latent_size * HIDDEN + HIDDEN * input_size)
    transcendentals = b_pad * (latent_size + 2)
    bytes_accessed = (
        4 * b_pad * (2 * input_size + 3 * latent_size)            # x, eps, recon, mu|lv
        + 2 * (input_size * HIDDEN + HIDDEN * lat2
               + latent_size * HIDDEN + HIDDEN * input_size)      # bf16 weights
        + 4 * (4 * HIDDEN + 2 * lat2 + input_size)                # f32 small vectors
    )

    args = (
        packed["a"], x_pad, eps_pad,
        packed["w1"], packed["b1"], packed["g1"], packed["beta1"],
        packed["w_mulv"], packed["b_mulv"],
        packed["w3"], packed["b3"], packed["g2"], packed["beta2"],
        packed["w4"], packed["b4"],
    )

    return pl.pallas_call(
        functools.partial(vae_kernel, latent_size=latent_size),
        out_shape=out_shapes,
        grid=(n_tiles,),
        in_specs=in_specs,
        out_specs=out_specs,
        compiler_params=pltpu.CompilerParams(
            dimension_semantics=("parallel",),        # megacore on v7x
            vmem_limit_bytes=vmem_limit,
        ),
        cost_estimate=pl.CostEstimate(
            flops=flops,
            transcendentals=transcendentals,
            bytes_accessed=bytes_accessed,
        ),
    )(*args)


def vae_forward(x, eps, packed):
    """x: [B, input_size] f32, eps: [B, latent_size] f32, packed: pack_params(...)."""
    B, input_size = x.shape
    latent_size = eps.shape[1]

    vmem_cap = 64 * 2**20                     # conservative default (v7x ceiling)
    try:
        vmem_cap = int(pltpu.get_tpu_info().vmem_capacity_bytes)
    except Exception:
        pass

    tile_b, n_tiles = _pick_tiling(B, input_size, latent_size, vmem_cap)
    b_pad = tile_b * n_tiles
    est = _vmem_estimate_bytes(tile_b, input_size, latent_size)
    vmem_limit = int(min(int(0.9 * vmem_cap), max(4 * est, 32 * 2**20)))

    # Only the batch dim is ever padded (zero rows are inert through the net);
    # feature dims keep their true widths -> no wrapper-side lane inflation.
    if b_pad != B:
        x_in = jnp.pad(x, ((0, b_pad - B), (0, 0)))
        eps_in = jnp.pad(eps, ((0, b_pad - B), (0, 0)))
    else:
        x_in, eps_in = x, eps

    kwargs = dict(input_size=input_size, latent_size=latent_size,
                  tile_b=tile_b, n_tiles=n_tiles, vmem_limit=vmem_limit)
    try:
        recon_p, mulv_p = _vae_call(x_in, eps_in, packed,
                                    resident_buffered=True, **kwargs)
    except Exception:
        # Fallback in case this jax/libtpu build rejects pl.Buffered(1) on
        # pallas_call BlockSpecs; semantics are identical.
        recon_p, mulv_p = _vae_call(x_in, eps_in, packed,
                                    resident_buffered=False, **kwargs)

    recon = recon_p[:B] if b_pad != B else recon_p
    mu = mulv_p[:B, :latent_size]
    logvar = mulv_p[:B, latent_size:]
    return recon, mu, logvar


# ----------------------------------------------------------------------------
# Parameter construction (PyTorch-equivalent init) and packing for the kernel.
# ----------------------------------------------------------------------------

def init_params(key, input_size, latent_size):
    """Deterministic params matching the module's __init__ / xavier_normal_."""
    def xavier_normal(k, fan_in, fan_out):
        std = jnp.sqrt(2.0 / (fan_in + fan_out))
        return jax.random.normal(k, (fan_in, fan_out), dtype=jnp.float32) * std

    keys = jax.random.split(key, 5)
    return {
        "w1": xavier_normal(keys[0], input_size, HIDDEN),
        "b1": jnp.zeros((1, HIDDEN), jnp.float32),
        "a1": jnp.full((1,), 0.25, jnp.float32),          # prelu1 scalar
        "g1": jnp.ones((1, HIDDEN), jnp.float32),
        "beta1": jnp.zeros((1, HIDDEN), jnp.float32),
        "w21": xavier_normal(keys[1], HIDDEN, latent_size),
        "b21": jnp.zeros((1, latent_size), jnp.float32),
        "w22": xavier_normal(keys[2], HIDDEN, latent_size),
        "b22": jnp.zeros((1, latent_size), jnp.float32),
        "w3": xavier_normal(keys[3], latent_size, HIDDEN),
        "b3": jnp.zeros((1, HIDDEN), jnp.float32),
        "a2": jnp.full((1,), 0.25, jnp.float32),          # prelu2 scalar
        "g2": jnp.ones((1, HIDDEN), jnp.float32),
        "beta2": jnp.zeros((1, HIDDEN), jnp.float32),
        "w4": xavier_normal(keys[4], HIDDEN, input_size),
        "b4": jnp.zeros((1, input_size), jnp.float32),
        # note: prelu3 exists in the module but is unused in forward()
    }


def pack_params(p):
    """Fuse fc21/fc22 into one projection; cast matmul weights to bf16.
    Feature dims keep their true (unpadded) widths."""
    return {
        "a": jnp.concatenate([p["a1"], p["a2"]]).astype(jnp.float32),   # (2,) SMEM
        "w1": p["w1"].astype(jnp.bfloat16),
        "b1": p["b1"], "g1": p["g1"], "beta1": p["beta1"],
        "w_mulv": jnp.concatenate([p["w21"], p["w22"]], axis=1).astype(jnp.bfloat16),
        "b_mulv": jnp.concatenate([p["b21"], p["b22"]], axis=1),
        "w3": p["w3"].astype(jnp.bfloat16),
        "b3": p["b3"], "g2": p["g2"], "beta2": p["beta2"],
        "w4": p["w4"].astype(jnp.bfloat16),
        "b4": p["b4"],
    }


# ----------------------------------------------------------------------------
# Pure-JAX references.
# ----------------------------------------------------------------------------

def _ref_dot_bf16(x, w):
    return jnp.dot(x.astype(jnp.bfloat16), w.astype(jnp.bfloat16),
                   preferred_element_type=jnp.float32)


def _vae_ref(x, eps, p, dot):
    h1 = dot(x, p["w1"]) + p["b1"]
    h1 = _prelu(h1, p["a1"][0])
    h1 = _layernorm(h1, p["g1"], p["beta1"])
    mu = dot(h1, p["w21"]) + p["b21"]
    logvar = dot(h1, p["w22"]) + p["b22"]
    z = mu + eps * jnp.exp(0.5 * logvar)
    h3 = dot(z, p["w3"]) + p["b3"]
    h3 = _prelu(h3, p["a2"][0])
    h3 = _layernorm(h3, p["g2"], p["beta2"])
    return dot(h3, p["w4"]) + p["b4"], mu, logvar


def vae_forward_ref_bf16(x, eps, p):
    """Matches the kernel's bf16-operand / f32-accumulate matmuls."""
    return _vae_ref(x, eps, p, _ref_dot_bf16)


def vae_forward_ref_f32(x, eps, p):
    """Exact f32 reference of the original module."""
    return _vae_ref(x, eps, p, lambda a, b: jnp.dot(a, b))


if __name__ == "__main__":
    # Small synthetic shapes consistent with the module.
    # TODO(synk): input_size/latent_size come from torch.load(inference_info.pth);
    # hard-coded here, and eps is passed explicitly instead of torch.randn_like.
    B, INPUT_SIZE, LATENT_SIZE = 8, 32, 8

    key = jax.random.PRNGKey(0)
    k_x, k_eps, k_params = jax.random.split(key, 3)

    x = jax.random.normal(k_x, (B, INPUT_SIZE), dtype=jnp.float32)
    eps = jax.random.normal(k_eps, (B, LATENT_SIZE), dtype=jnp.float32)

    params = init_params(k_params, INPUT_SIZE, LATENT_SIZE)
    packed = pack_params(params)

    recon, mu, logvar = vae_forward(x, eps, packed)
    jax.block_until_ready((recon, mu, logvar))

    assert recon.shape == (B, INPUT_SIZE)
    assert mu.shape == (B, LATENT_SIZE) and logvar.shape == (B, LATENT_SIZE)

    # Primary check: against a reference using the same bf16-operand matmuls.
    r_b, mu_b, lv_b = vae_forward_ref_bf16(x, eps, params)
    assert jnp.allclose(recon, r_b, atol=2e-3, rtol=2e-3)
    assert jnp.allclose(mu, mu_b, atol=2e-3, rtol=2e-3)
    assert jnp.allclose(logvar, lv_b, atol=2e-3, rtol=2e-3)

    # Secondary sanity check: exact-f32 module semantics (looser; bf16 MXU operands).
    r_f, mu_f, lv_f = vae_forward_ref_f32(x, eps, params)
    assert jnp.allclose(recon, r_f, atol=5e-2, rtol=5e-2)
    assert jnp.allclose(mu, mu_f, atol=5e-2, rtol=5e-2)
    assert jnp.allclose(logvar, lv_f, atol=5e-2, rtol=5e-2)

    print("KERNEL_OK")
</pallas_src>

<mosaic_0001>
module attributes {stable_mosaic.version = 11 : i64} {
  func.func @vae_kernel(%arg0: i32, %arg1: memref<2xf32, #tpu.memory_space<smem>>, %arg2: memref<16x32xf32, #tpu.memory_space<vmem>>, %arg3: memref<16x8xf32, #tpu.memory_space<vmem>>, %arg4: memref<32x256xbf16, #tpu.memory_space<vmem>>, %arg5: memref<1x256xf32, #tpu.memory_space<vmem>>, %arg6: memref<1x256xf32, #tpu.memory_space<vmem>>, %arg7: memref<1x256xf32, #tpu.memory_space<vmem>>, %arg8: memref<256x16xbf16, #tpu.memory_space<vmem>>, %arg9: memref<1x16xf32, #tpu.memory_space<vmem>>, %arg10: memref<8x256xbf16, #tpu.memory_space<vmem>>, %arg11: memref<1x256xf32, #tpu.memory_space<vmem>>, %arg12: memref<1x256xf32, #tpu.memory_space<vmem>>, %arg13: memref<1x256xf32, #tpu.memory_space<vmem>>, %arg14: memref<256x32xbf16, #tpu.memory_space<vmem>>, %arg15: memref<1x32xf32, #tpu.memory_space<vmem>>, %arg16: memref<16x32xf32, #tpu.memory_space<vmem>>, %arg17: memref<16x16xf32, #tpu.memory_space<vmem>>) attributes {dimension_semantics = [#tpu.dimension_semantics<parallel>], iteration_bounds = array<i64: 1>, scalar_prefetch = 0 : i64, scratch_operands = 0 : i64, tpu.core_type = #tpu.core_type<tc>, window_params = [{transform_indices = @transform_0, window_bounds = array<i64: 2>}, {transform_indices = @transform_1, window_bounds = array<i64: 16, 32>}, {transform_indices = @transform_2, window_bounds = array<i64: 16, 8>}, {pipeline_mode = #tpu.pipeline_mode<synchronous>, transform_indices = @transform_3, window_bounds = array<i64: 32, 256>}, {pipeline_mode = #tpu.pipeline_mode<synchronous>, transform_indices = @transform_4, window_bounds = array<i64: 1, 256>}, {pipeline_mode = #tpu.pipeline_mode<synchronous>, transform_indices = @transform_5, window_bounds = array<i64: 1, 256>}, {pipeline_mode = #tpu.pipeline_mode<synchronous>, transform_indices = @transform_6, window_bounds = array<i64: 1, 256>}, {pipeline_mode = #tpu.pipeline_mode<synchronous>, transform_indices = @transform_7, window_bounds = array<i64: 256, 16>}, {pipeline_mode = #tpu.pipeline_mode<synchronous>, transform_indices = @transform_8, window_bounds = array<i64: 1, 16>}, {pipeline_mode = #tpu.pipeline_mode<synchronous>, transform_indices = @transform_9, window_bounds = array<i64: 8, 256>}, {pipeline_mode = #tpu.pipeline_mode<synchronous>, transform_indices = @transform_10, window_bounds = array<i64: 1, 256>}, {pipeline_mode = #tpu.pipeline_mode<synchronous>, transform_indices = @transform_11, window_bounds = array<i64: 1, 256>}, {pipeline_mode = #tpu.pipeline_mode<synchronous>, transform_indices = @transform_12, window_bounds = array<i64: 1, 256>}, {pipeline_mode = #tpu.pipeline_mode<synchronous>, transform_indices = @transform_13, window_bounds = array<i64: 256, 32>}, {pipeline_mode = #tpu.pipeline_mode<synchronous>, transform_indices = @transform_14, window_bounds = array<i64: 1, 32>}, {transform_indices = @transform_15, window_bounds = array<i64: 16, 32>}, {transform_indices = @transform_16, window_bounds = array<i64: 16, 16>}]} {
    %c0 = arith.constant 0 : index
    %0 = memref.load %arg1[%c0] : memref<2xf32, #tpu.memory_space<smem>>
    %c1 = arith.constant 1 : index
    %1 = memref.load %arg1[%c1] : memref<2xf32, #tpu.memory_space<smem>>
    %c0_0 = arith.constant 0 : index
    %c0_1 = arith.constant 0 : index
    %2 = vector.load %arg2[%c0_0, %c0_1] : memref<16x32xf32, #tpu.memory_space<vmem>>, vector<16x32xf32>
    %3 = arith.truncf %2 : vector<16x32xf32> to vector<16x32xbf16>
    %c0_2 = arith.constant 0 : index
    %c0_3 = arith.constant 0 : index
    %4 = vector.load %arg4[%c0_2, %c0_3] : memref<32x256xbf16, #tpu.memory_space<vmem>>, vector<32x256xbf16>
    %cst = arith.constant dense<0.000000e+00> : vector<16x256xf32>
    %5 = tpu.matmul %3, %4, %cst {dimension_numbers = #tpu.dot_dimension_numbers<[1], [0], [0], [1], [0, 0, 1, 1], [], []>} : vector<16x32xbf16>, vector<32x256xbf16>, vector<16x256xf32> -> vector<16x256xf32>
    %c0_4 = arith.constant 0 : index
    %c0_5 = arith.constant 0 : index
    %6 = vector.load %arg5[%c0_4, %c0_5] : memref<1x256xf32, #tpu.memory_space<vmem>>, vector<1x256xf32>
    %7 = vector.broadcast %6 : vector<1x256xf32> to vector<16x256xf32>
    %8 = arith.addf %5, %7 : vector<16x256xf32>
    %cst_6 = arith.constant 0.000000e+00 : f32
    %9 = vector.broadcast %cst_6 : f32 to vector<16x256xf32>
    %10 = arith.maximumf %8, %9 : vector<16x256xf32>
    %cst_7 = arith.constant 0.000000e+00 : f32
    %11 = vector.broadcast %cst_7 : f32 to vector<16x256xf32>
    %12 = arith.minimumf %8, %11 : vector<16x256xf32>
    %13 = vector.broadcast %0 : f32 to vector<16x256xf32>
    %14 = arith.mulf %13, %12 : vector<16x256xf32>
    %15 = arith.addf %10, %14 : vector<16x256xf32>
    %c0_8 = arith.constant 0 : index
    %c0_9 = arith.constant 0 : index
    %16 = vector.load %arg6[%c0_8, %c0_9] : memref<1x256xf32, #tpu.memory_space<vmem>>, vector<1x256xf32>
    %c0_10 = arith.constant 0 : index
    %c0_11 = arith.constant 0 : index
    %17 = vector.load %arg7[%c0_10, %c0_11] : memref<1x256xf32, #tpu.memory_space<vmem>>, vector<1x256xf32>
    %cst_12 = arith.constant dense<0.000000e+00> : vector<16xf32>
    %18 = vector.multi_reduction <add>, %15, %cst_12 [1] : vector<16x256xf32> to vector<16xf32>
    %19 = vector.shape_cast %18 : vector<16xf32> to vector<16x1xf32>
    %cst_13 = arith.constant 2.560000e+02 : f32
    %20 = vector.broadcast %cst_13 : f32 to vector<16x1xf32>
    %21 = arith.divf %19, %20 : vector<16x1xf32>
    %22 = vector.broadcast %21 : vector<16x1xf32> to vector<16x256xf32>
    %23 = arith.subf %15, %22 : vector<16x256xf32>
    %24 = arith.mulf %23, %23 : vector<16x256xf32>
    %cst_14 = arith.constant dense<0.000000e+00> : vector<16xf32>
    %25 = vector.multi_reduction <add>, %24, %cst_14 [1] : vector<16x256xf32> to vector<16xf32>
    %26 = vector.shape_cast %25 : vector<16xf32> to vector<16x1xf32>
    %cst_15 = arith.constant 2.560000e+02 : f32
    %27 = vector.broadcast %cst_15 : f32 to vector<16x1xf32>
    %28 = arith.divf %26, %27 : vector<16x1xf32>
    %cst_16 = arith.constant 9.99999996E-13 : f32
    %29 = vector.broadcast %cst_16 : f32 to vector<16x1xf32>
    %30 = arith.addf %28, %29 : vector<16x1xf32>
    %31 = math.rsqrt %30 : vector<16x1xf32>
    %32 = vector.broadcast %21 : vector<16x1xf32> to vector<16x256xf32>
    %33 = arith.subf %15, %32 : vector<16x256xf32>
    %34 = vector.broadcast %31 : vector<16x1xf32> to vector<16x256xf32>
    %35 = arith.mulf %33, %34 : vector<16x256xf32>
    %36 = vector.broadcast %16 : vector<1x256xf32> to vector<16x256xf32>
    %37 = arith.mulf %35, %36 : vector<16x256xf32>
    %38 = vector.broadcast %17 : vector<1x256xf32> to vector<16x256xf32>
    %39 = arith.addf %37, %38 : vector<16x256xf32>
    %40 = arith.truncf %39 : vector<16x256xf32> to vector<16x256xbf16>
    %c0_17 = arith.constant 0 : index
    %c0_18 = arith.constant 0 : index
    %41 = vector.load %arg8[%c0_17, %c0_18] : memref<256x16xbf16, #tpu.memory_space<vmem>>, vector<256x16xbf16>
    %cst_19 = arith.constant dense<0.000000e+00> : vector<16x16xf32>
    %42 = tpu.matmul %40, %41, %cst_19 {dimension_numbers = #tpu.dot_dimension_numbers<[1], [0], [0], [1], [0, 0, 1, 1], [], []>} : vector<16x256xbf16>, vector<256x16xbf16>, vector<16x16xf32> -> vector<16x16xf32>
    %c0_20 = arith.constant 0 : index
    %c0_21 = arith.constant 0 : index
    %43 = vector.load %arg9[%c0_20, %c0_21] : memref<1x16xf32, #tpu.memory_space<vmem>>, vector<1x16xf32>
    %44 = vector.broadcast %43 : vector<1x16xf32> to vector<16x16xf32>
    %45 = arith.addf %42, %44 : vector<16x16xf32>
    %46 = vector.extract_strided_slice %45 {offsets = [0, 0], sizes = [16, 8], strides = [1, 1]} : vector<16x16xf32> to vector<16x8xf32>
    %47 = vector.extract_strided_slice %45 {offsets = [0, 8], sizes = [16, 8], strides = [1, 1]} : vector<16x16xf32> to vector<16x8xf32>
    %c0_22 = arith.constant 0 : index
    %c0_23 = arith.constant 0 : index
    %48 = vector.load %arg3[%c0_22, %c0_23] : memref<16x8xf32, #tpu.memory_space<vmem>>, vector<16x8xf32>
    %cst_24 = arith.constant 5.000000e-01 : f32
    %49 = vector.broadcast %cst_24 : f32 to vector<16x8xf32>
    %50 = arith.mulf %49, %47 : vector<16x8xf32>
    %51 = math.exp %50 : vector<16x8xf32>
    %52 = arith.mulf %48, %51 : vector<16x8xf32>
    %53 = arith.addf %46, %52 : vector<16x8xf32>
    %54 = arith.truncf %53 : vector<16x8xf32> to vector<16x8xbf16>
    %c0_25 = arith.constant 0 : index
    %c0_26 = arith.constant 0 : index
    %55 = vector.load %arg10[%c0_25, %c0_26] : memref<8x256xbf16, #tpu.memory_space<vmem>>, vector<8x256xbf16>
    %cst_27 = arith.constant dense<0.000000e+00> : vector<16x256xf32>
    %56 = tpu.matmul %54, %55, %cst_27 {dimension_numbers = #tpu.dot_dimension_numbers<[1], [0], [0], [1], [0, 0, 1, 1], [], []>} : vector<16x8xbf16>, vector<8x256xbf16>, vector<16x256xf32> -> vector<16x256xf32>
    %c0_28 = arith.constant 0 : index
    %c0_29 = arith.constant 0 : index
    %57 = vector.load %arg11[%c0_28, %c0_29] : memref<1x256xf32, #tpu.memory_space<vmem>>, vector<1x256xf32>
    %58 = vector.broadcast %57 : vector<1x256xf32> to vector<16x256xf32>
    %59 = arith.addf %56, %58 : vector<16x256xf32>
    %cst_30 = arith.constant 0.000000e+00 : f32
    %60 = vector.broadcast %cst_30 : f32 to vector<16x256xf32>
    %61 = arith.maximumf %59, %60 : vector<16x256xf32>
    %cst_31 = arith.constant 0.000000e+00 : f32
    %62 = vector.broadcast %cst_31 : f32 to vector<16x256xf32>
    %63 = arith.minimumf %59, %62 : vector<16x256xf32>
    %64 = vector.broadcast %1 : f32 to vector<16x256xf32>
    %65 = arith.mulf %64, %63 : vector<16x256xf32>
    %66 = arith.addf %61, %65 : vector<16x256xf32>
    %c0_32 = arith.constant 0 : index
    %c0_33 = arith.constant 0 : index
    %67 = vector.load %arg12[%c0_32, %c0_33] : memref<1x256xf32, #tpu.memory_space<vmem>>, vector<1x256xf32>
    %c0_34 = arith.constant 0 : index
    %c0_35 = arith.constant 0 : index
    %68 = vector.load %arg13[%c0_34, %c0_35] : memref<1x256xf32, #tpu.memory_space<vmem>>, vector<1x256xf32>
    %cst_36 = arith.constant dense<0.000000e+00> : vector<16xf32>
    %69 = vector.multi_reduction <add>, %66, %cst_36 [1] : vector<16x256xf32> to vector<16xf32>
    %70 = vector.shape_cast %69 : vector<16xf32> to vector<16x1xf32>
    %cst_37 = arith.constant 2.560000e+02 : f32
    %71 = vector.broadcast %cst_37 : f32 to vector<16x1xf32>
    %72 = arith.divf %70, %71 : vector<16x1xf32>
    %73 = vector.broadcast %72 : vector<16x1xf32> to vector<16x256xf32>
    %74 = arith.subf %66, %73 : vector<16x256xf32>
    %75 = arith.mulf %74, %74 : vector<16x256xf32>
    %cst_38 = arith.constant dense<0.000000e+00> : vector<16xf32>
    %76 = vector.multi_reduction <add>, %75, %cst_38 [1] : vector<16x256xf32> to vector<16xf32>
    %77 = vector.shape_cast %76 : vector<16xf32> to vector<16x1xf32>
    %cst_39 = arith.constant 2.560000e+02 : f32
    %78 = vector.broadcast %cst_39 : f32 to vector<16x1xf32>
    %79 = arith.divf %77, %78 : vector<16x1xf32>
    %cst_40 = arith.constant 9.99999996E-13 : f32
    %80 = vector.broadcast %cst_40 : f32 to vector<16x1xf32>
    %81 = arith.addf %79, %80 : vector<16x1xf32>
    %82 = math.rsqrt %81 : vector<16x1xf32>
    %83 = vector.broadcast %72 : vector<16x1xf32> to vector<16x256xf32>
    %84 = arith.subf %66, %83 : vector<16x256xf32>
    %85 = vector.broadcast %82 : vector<16x1xf32> to vector<16x256xf32>
    %86 = arith.mulf %84, %85 : vector<16x256xf32>
    %87 = vector.broadcast %67 : vector<1x256xf32> to vector<16x256xf32>
    %88 = arith.mulf %86, %87 : vector<16x256xf32>
    %89 = vector.broadcast %68 : vector<1x256xf32> to vector<16x256xf32>
    %90 = arith.addf %88, %89 : vector<16x256xf32>
    %91 = arith.truncf %90 : vector<16x256xf32> to vector<16x256xbf16>
    %c0_41 = arith.constant 0 : index
    %c0_42 = arith.constant 0 : index
    %92 = vector.load %arg14[%c0_41, %c0_42] : memref<256x32xbf16, #tpu.memory_space<vmem>>, vector<256x32xbf16>
    %cst_43 = arith.constant dense<0.000000e+00> : vector<16x32xf32>
    %93 = tpu.matmul %91, %92, %cst_43 {dimension_numbers = #tpu.dot_dimension_numbers<[1], [0], [0], [1], [0, 0, 1, 1], [], []>} : vector<16x256xbf16>, vector<256x32xbf16>, vector<16x32xf32> -> vector<16x32xf32>
    %c0_44 = arith.constant 0 : index
    %c0_45 = arith.constant 0 : index
    %94 = vector.load %arg15[%c0_44, %c0_45] : memref<1x32xf32, #tpu.memory_space<vmem>>, vector<1x32xf32>
    %95 = vector.broadcast %94 : vector<1x32xf32> to vector<16x32xf32>
    %96 = arith.addf %93, %95 : vector<16x32xf32>
    %c0_46 = arith.constant 0 : index
    %c0_47 = arith.constant 0 : index
    %97 = vector.load %arg16[%c0_46, %c0_47] : memref<16x32xf32, #tpu.memory_space<vmem>>, vector<16x32xf32>
    tpu.vector_store %arg16[%c0_46, %c0_47], %96 {strides = array<i32>} : memref<16x32xf32, #tpu.memory_space<vmem>>, vector<16x32xf32>,
    %c0_48 = arith.constant 0 : index
    %c0_49 = arith.constant 0 : index
    %98 = vector.load %arg17[%c0_48, %c0_49] : memref<16x16xf32, #tpu.memory_space<vmem>>, vector<16x16xf32>
    tpu.vector_store %arg17[%c0_48, %c0_49], %45 {strides = array<i32>} : memref<16x16xf32, #tpu.memory_space<vmem>>, vector<16x16xf32>,
    return
  }
  func.func @transform_0(%arg0: i32) -> i32 {
    %c0_i32 = arith.constant 0 : i32
    %c0_i32_0 = arith.constant 0 : i32
    return %c0_i32 : i32
  }
  func.func @transform_1(%arg0: i32) -> (i32, i32) {
    %c0_i32 = arith.constant 0 : i32
    %c0_i32_0 = arith.constant 0 : i32
    return %arg0, %c0_i32 : i32, i32
  }
  func.func @transform_2(%arg0: i32) -> (i32, i32) {
    %c0_i32 = arith.constant 0 : i32
    %c0_i32_0 = arith.constant 0 : i32
    return %arg0, %c0_i32 : i32, i32
  }
  func.func @transform_3(%arg0: i32) -> (i32, i32) {
    %c0_i32 = arith.constant 0 : i32
    %c0_i32_0 = arith.constant 0 : i32
    %c0_i32_1 = arith.constant 0 : i32
    return %c0_i32, %c0_i32_0 : i32, i32
  }
  func.func @transform_4(%arg0: i32) -> (i32, i32) {
    %c0_i32 = arith.constant 0 : i32
    %c0_i32_0 = arith.constant 0 : i32
    %c0_i32_1 = arith.constant 0 : i32
    return %c0_i32, %c0_i32_0 : i32, i32
  }
  func.func @transform_5(%arg0: i32) -> (i32, i32) {
    %c0_i32 = arith.constant 0 : i32
    %c0_i32_0 = arith.constant 0 : i32
    %c0_i32_1 = arith.constant 0 : i32
    return %c0_i32, %c0_i32_0 : i32, i32
  }
  func.func @transform_6(%arg0: i32) -> (i32, i32) {
    %c0_i32 = arith.constant 0 : i32
    %c0_i32_0 = arith.constant 0 : i32
    %c0_i32_1 = arith.constant 0 : i32
    return %c0_i32, %c0_i32_0 : i32, i32
  }
  func.func @transform_7(%arg0: i32) -> (i32, i32) {
    %c0_i32 = arith.constant 0 : i32
    %c0_i32_0 = arith.constant 0 : i32
    %c0_i32_1 = arith.constant 0 : i32
    return %c0_i32, %c0_i32_0 : i32, i32
  }
  func.func @transform_8(%arg0: i32) -> (i32, i32) {
    %c0_i32 = arith.constant 0 : i32
    %c0_i32_0 = arith.constant 0 : i32
    %c0_i32_1 = arith.constant 0 : i32
    return %c0_i32, %c0_i32_0 : i32, i32
  }
  func.func @transform_9(%arg0: i32) -> (i32, i32) {
    %c0_i32 = arith.constant 0 : i32
    %c0_i32_0 = arith.constant 0 : i32
    %c0_i32_1 = arith.constant 0 : i32
    return %c0_i32, %c0_i32_0 : i32, i32
  }
  func.func @transform_10(%arg0: i32) -> (i32, i32) {
    %c0_i32 = arith.constant 0 : i32
    %c0_i32_0 = arith.constant 0 : i32
    %c0_i32_1 = arith.constant 0 : i32
    return %c0_i32, %c0_i32_0 : i32, i32
  }
  func.func @transform_11(%arg0: i32) -> (i32, i32) {
    %c0_i32 = arith.constant 0 : i32
    %c0_i32_0 = arith.constant 0 : i32
    %c0_i32_1 = arith.constant 0 : i32
    return %c0_i32, %c0_i32_0 : i32, i32
  }
  func.func @transform_12(%arg0: i32) -> (i32, i32) {
    %c0_i32 = arith.constant 0 : i32
    %c0_i32_0 = arith.constant 0 : i32
    %c0_i32_1 = arith.constant 0 : i32
    return %c0_i32, %c0_i32_0 : i32, i32
  }
  func.func @transform_13(%arg0: i32) -> (i32, i32) {
    %c0_i32 = arith.constant 0 : i32
    %c0_i32_0 = arith.constant 0 : i32
    %c0_i32_1 = arith.constant 0 : i32
    return %c0_i32, %c0_i32_0 : i32, i32
  }
  func.func @transform_14(%arg0: i32) -> (i32, i32) {
    %c0_i32 = arith.constant 0 : i32
    %c0_i32_0 = arith.constant 0 : i32
    %c0_i32_1 = arith.constant 0 : i32
    return %c0_i32, %c0_i32_0 : i32, i32
  }
  func.func @transform_15(%arg0: i32) -> (i32, i32) {
    %c0_i32 = arith.constant 0 : i32
    %c0_i32_0 = arith.constant 0 : i32
    return %arg0, %c0_i32 : i32, i32
  }
  func.func @transform_16(%arg0: i32) -> (i32, i32) {
    %c0_i32 = arith.constant 0 : i32
    %c0_i32_0 = arith.constant 0 : i32
    return %arg0, %c0_i32 : i32, i32
  }
}

module attributes {stable_mosaic.version = 11 : i64} {
  func.func @vae_kernel(%arg0: i32, %arg1: memref<2xf32, #tpu.memory_space<smem>>, %arg2: memref<16x32xf32, #tpu.memory_space<vmem>>, %arg3: memref<16x8xf32, #tpu.memory_space<vmem>>, %arg4: memref<32x256xbf16, #tpu.memory_space<vmem>>, %arg5: memref<1x256xf32, #tpu.memory_space<vmem>>, %arg6: memref<1x256xf32, #tpu.memory_space<vmem>>, %arg7: memref<1x256xf32, #tpu.memory_space<vmem>>, %arg8: memref<256x16xbf16, #tpu.memory_space<vmem>>, %arg9: memref<1x16xf32, #tpu.memory_space<vmem>>, %arg10: memref<8x256xbf16, #tpu.memory_space<vmem>>, %arg11: memref<1x256xf32, #tpu.memory_space<vmem>>, %arg12: memref<1x256xf32, #tpu.memory_space<vmem>>, %arg13: memref<1x256xf32, #tpu.memory_space<vmem>>, %arg14: memref<256x32xbf16, #tpu.memory_space<vmem>>, %arg15: memref<1x32xf32, #tpu.memory_space<vmem>>, %arg16: memref<16x32xf32, #tpu.memory_space<vmem>>, %arg17: memref<16x16xf32, #tpu.memory_space<vmem>>) attributes {dimension_semantics = [#tpu.dimension_semantics<parallel>], iteration_bounds = array<i64: 1>, scalar_prefetch = 0 : i64, scratch_operands = 0 : i64, tpu.core_type = #tpu.core_type<tc>, window_params = [{transform_indices = @transform_0, window_bounds = array<i64: 2>}, {transform_indices = @transform_1, window_bounds = array<i64: 16, 32>}, {transform_indices = @transform_2, window_bounds = array<i64: 16, 8>}, {pipeline_mode = #tpu.pipeline_mode<synchronous>, transform_indices = @transform_3, window_bounds = array<i64: 32, 256>}, {pipeline_mode = #tpu.pipeline_mode<synchronous>, transform_indices = @transform_4, window_bounds = array<i64: 1, 256>}, {pipeline_mode = #tpu.pipeline_mode<synchronous>, transform_indices = @transform_5, window_bounds = array<i64: 1, 256>}, {pipeline_mode = #tpu.pipeline_mode<synchronous>, transform_indices = @transform_6, window_bounds = array<i64: 1, 256>}, {pipeline_mode = #tpu.pipeline_mode<synchronous>, transform_indices = @transform_7, window_bounds = array<i64: 256, 16>}, {pipeline_mode = #tpu.pipeline_mode<synchronous>, transform_indices = @transform_8, window_bounds = array<i64: 1, 16>}, {pipeline_mode = #tpu.pipeline_mode<synchronous>, transform_indices = @transform_9, window_bounds = array<i64: 8, 256>}, {pipeline_mode = #tpu.pipeline_mode<synchronous>, transform_indices = @transform_10, window_bounds = array<i64: 1, 256>}, {pipeline_mode = #tpu.pipeline_mode<synchronous>, transform_indices = @transform_11, window_bounds = array<i64: 1, 256>}, {pipeline_mode = #tpu.pipeline_mode<synchronous>, transform_indices = @transform_12, window_bounds = array<i64: 1, 256>}, {pipeline_mode = #tpu.pipeline_mode<synchronous>, transform_indices = @transform_13, window_bounds = array<i64: 256, 32>}, {pipeline_mode = #tpu.pipeline_mode<synchronous>, transform_indices = @transform_14, window_bounds = array<i64: 1, 32>}, {transform_indices = @transform_15, window_bounds = array<i64: 16, 32>}, {transform_indices = @transform_16, window_bounds = array<i64: 16, 16>}]} {
    %c0 = arith.constant 0 : index
    %0 = memref.load %arg1[%c0] : memref<2xf32, #tpu.memory_space<smem>>
    %c1 = arith.constant 1 : index
    %1 = memref.load %arg1[%c1] : memref<2xf32, #tpu.memory_space<smem>>
    %c0_0 = arith.constant 0 : index
    %c0_1 = arith.constant 0 : index
    %2 = vector.load %arg2[%c0_0, %c0_1] : memref<16x32xf32, #tpu.memory_space<vmem>>, vector<16x32xf32>
    %3 = arith.truncf %2 : vector<16x32xf32> to vector<16x32xbf16>
    %c0_2 = arith.constant 0 : index
    %c0_3 = arith.constant 0 : index
    %4 = vector.load %arg4[%c0_2, %c0_3] : memref<32x256xbf16, #tpu.memory_space<vmem>>, vector<32x256xbf16>
    %cst = arith.constant dense<0.000000e+00> : vector<16x256xf32>
    %5 = tpu.matmul %3, %4, %cst {dimension_numbers = #tpu.dot_dimension_numbers<[1], [0], [0], [1], [0, 0, 1, 1], [], []>} : vector<16x32xbf16>, vector<32x256xbf16>, vector<16x256xf32> -> vector<16x256xf32>
    %c0_4 = arith.constant 0 : index
    %c0_5 = arith.constant 0 : index
    %6 = vector.load %arg5[%c0_4, %c0_5] : memref<1x256xf32, #tpu.memory_space<vmem>>, vector<1x256xf32>
    %7 = vector.broadcast %6 : vector<1x256xf32> to vector<16x256xf32>
    %8 = arith.addf %5, %7 : vector<16x256xf32>
    %cst_6 = arith.constant 0.000000e+00 : f32
    %9 = vector.broadcast %cst_6 : f32 to vector<16x256xf32>
    %10 = arith.maximumf %8, %9 : vector<16x256xf32>
    %cst_7 = arith.constant 0.000000e+00 : f32
    %11 = vector.broadcast %cst_7 : f32 to vector<16x256xf32>
    %12 = arith.minimumf %8, %11 : vector<16x256xf32>
    %13 = vector.broadcast %0 : f32 to vector<16x256xf32>
    %14 = arith.mulf %13, %12 : vector<16x256xf32>
    %15 = arith.addf %10, %14 : vector<16x256xf32>
    %c0_8 = arith.constant 0 : index
    %c0_9 = arith.constant 0 : index
    %16 = vector.load %arg6[%c0_8, %c0_9] : memref<1x256xf32, #tpu.memory_space<vmem>>, vector<1x256xf32>
    %c0_10 = arith.constant 0 : index
    %c0_11 = arith.constant 0 : index
    %17 = vector.load %arg7[%c0_10, %c0_11] : memref<1x256xf32, #tpu.memory_space<vmem>>, vector<1x256xf32>
    %cst_12 = arith.constant dense<0.000000e+00> : vector<16xf32>
    %18 = vector.multi_reduction <add>, %15, %cst_12 [1] : vector<16x256xf32> to vector<16xf32>
    %19 = vector.shape_cast %18 : vector<16xf32> to vector<16x1xf32>
    %cst_13 = arith.constant 2.560000e+02 : f32
    %20 = vector.broadcast %cst_13 : f32 to vector<16x1xf32>
    %21 = arith.divf %19, %20 : vector<16x1xf32>
    %22 = vector.broadcast %21 : vector<16x1xf32> to vector<16x256xf32>
    %23 = arith.subf %15, %22 : vector<16x256xf32>
    %24 = arith.mulf %23, %23 : vector<16x256xf32>
    %cst_14 = arith.constant dense<0.000000e+00> : vector<16xf32>
    %25 = vector.multi_reduction <add>, %24, %cst_14 [1] : vector<16x256xf32> to vector<16xf32>
    %26 = vector.shape_cast %25 : vector<16xf32> to vector<16x1xf32>
    %cst_15 = arith.constant 2.560000e+02 : f32
    %27 = vector.broadcast %cst_15 : f32 to vector<16x1xf32>
    %28 = arith.divf %26, %27 : vector<16x1xf32>
    %cst_16 = arith.constant 9.99999996E-13 : f32
    %29 = vector.broadcast %cst_16 : f32 to vector<16x1xf32>
    %30 = arith.addf %28, %29 : vector<16x1xf32>
    %31 = math.rsqrt %30 : vector<16x1xf32>
    %32 = vector.broadcast %21 : vector<16x1xf32> to vector<16x256xf32>
    %33 = arith.subf %15, %32 : vector<16x256xf32>
    %34 = vector.broadcast %31 : vector<16x1xf32> to vector<16x256xf32>
    %35 = arith.mulf %33, %34 : vector<16x256xf32>
    %36 = vector.broadcast %16 : vector<1x256xf32> to vector<16x256xf32>
    %37 = arith.mulf %35, %36 : vector<16x256xf32>
    %38 = vector.broadcast %17 : vector<1x256xf32> to vector<16x256xf32>
    %39 = arith.addf %37, %38 : vector<16x256xf32>
    %40 = arith.truncf %39 : vector<16x256xf32> to vector<16x256xbf16>
    %c0_17 = arith.constant 0 : index
    %c0_18 = arith.constant 0 : index
    %41 = vector.load %arg8[%c0_17, %c0_18] : memref<256x16xbf16, #tpu.memory_space<vmem>>, vector<256x16xbf16>
    %cst_19 = arith.constant dense<0.000000e+00> : vector<16x16xf32>
    %42 = tpu.matmul %40, %41, %cst_19 {dimension_numbers = #tpu.dot_dimension_numbers<[1], [0], [0], [1], [0, 0, 1, 1], [], []>} : vector<16x256xbf16>, vector<256x16xbf16>, vector<16x16xf32> -> vector<16x16xf32>
    %c0_20 = arith.constant 0 : index
    %c0_21 = arith.constant 0 : index
    %43 = vector.load %arg9[%c0_20, %c0_21] : memref<1x16xf32, #tpu.memory_space<vmem>>, vector<1x16xf32>
    %44 = vector.broadcast %43 : vector<1x16xf32> to vector<16x16xf32>
    %45 = arith.addf %42, %44 : vector<16x16xf32>
    %46 = vector.extract_strided_slice %45 {offsets = [0, 0], sizes = [16, 8], strides = [1, 1]} : vector<16x16xf32> to vector<16x8xf32>
    %47 = vector.extract_strided_slice %45 {offsets = [0, 8], sizes = [16, 8], strides = [1, 1]} : vector<16x16xf32> to vector<16x8xf32>
    %c0_22 = arith.constant 0 : index
    %c0_23 = arith.constant 0 : index
    %48 = vector.load %arg3[%c0_22, %c0_23] : memref<16x8xf32, #tpu.memory_space<vmem>>, vector<16x8xf32>
    %cst_24 = arith.constant 5.000000e-01 : f32
    %49 = vector.broadcast %cst_24 : f32 to vector<16x8xf32>
    %50 = arith.mulf %49, %47 : vector<16x8xf32>
    %51 = math.exp %50 : vector<16x8xf32>
    %52 = arith.mulf %48, %51 : vector<16x8xf32>
    %53 = arith.addf %46, %52 : vector<16x8xf32>
    %54 = arith.truncf %53 : vector<16x8xf32> to vector<16x8xbf16>
    %c0_25 = arith.constant 0 : index
    %c0_26 = arith.constant 0 : index
    %55 = vector.load %arg10[%c0_25, %c0_26] : memref<8x256xbf16, #tpu.memory_space<vmem>>, vector<8x256xbf16>
    %cst_27 = arith.constant dense<0.000000e+00> : vector<16x256xf32>
    %56 = tpu.matmul %54, %55, %cst_27 {dimension_numbers = #tpu.dot_dimension_numbers<[1], [0], [0], [1], [0, 0, 1, 1], [], []>} : vector<16x8xbf16>, vector<8x256xbf16>, vector<16x256xf32> -> vector<16x256xf32>
    %c0_28 = arith.constant 0 : index
    %c0_29 = arith.constant 0 : index
    %57 = vector.load %arg11[%c0_28, %c0_29] : memref<1x256xf32, #tpu.memory_space<vmem>>, vector<1x256xf32>
    %58 = vector.broadcast %57 : vector<1x256xf32> to vector<16x256xf32>
    %59 = arith.addf %56, %58 : vector<16x256xf32>
    %cst_30 = arith.constant 0.000000e+00 : f32
    %60 = vector.broadcast %cst_30 : f32 to vector<16x256xf32>
    %61 = arith.maximumf %59, %60 : vector<16x256xf32>
    %cst_31 = arith.constant 0.000000e+00 : f32
    %62 = vector.broadcast %cst_31 : f32 to vector<16x256xf32>
    %63 = arith.minimumf %59, %62 : vector<16x256xf32>
    %64 = vector.broadcast %1 : f32 to vector<16x256xf32>
    %65 = arith.mulf %64, %63 : vector<16x256xf32>
    %66 = arith.addf %61, %65 : vector<16x256xf32>
    %c0_32 = arith.constant 0 : index
    %c0_33 = arith.constant 0 : index
    %67 = vector.load %arg12[%c0_32, %c0_33] : memref<1x256xf32, #tpu.memory_space<vmem>>, vector<1x256xf32>
    %c0_34 = arith.constant 0 : index
    %c0_35 = arith.constant 0 : index
    %68 = vector.load %arg13[%c0_34, %c0_35] : memref<1x256xf32, #tpu.memory_space<vmem>>, vector<1x256xf32>
    %cst_36 = arith.constant dense<0.000000e+00> : vector<16xf32>
    %69 = vector.multi_reduction <add>, %66, %cst_36 [1] : vector<16x256xf32> to vector<16xf32>
    %70 = vector.shape_cast %69 : vector<16xf32> to vector<16x1xf32>
    %cst_37 = arith.constant 2.560000e+02 : f32
    %71 = vector.broadcast %cst_37 : f32 to vector<16x1xf32>
    %72 = arith.divf %70, %71 : vector<16x1xf32>
    %73 = vector.broadcast %72 : vector<16x1xf32> to vector<16x256xf32>
    %74 = arith.subf %66, %73 : vector<16x256xf32>
    %75 = arith.mulf %74, %74 : vector<16x256xf32>
    %cst_38 = arith.constant dense<0.000000e+00> : vector<16xf32>
    %76 = vector.multi_reduction <add>, %75, %cst_38 [1] : vector<16x256xf32> to vector<16xf32>
    %77 = vector.shape_cast %76 : vector<16xf32> to vector<16x1xf32>
    %cst_39 = arith.constant 2.560000e+02 : f32
    %78 = vector.broadcast %cst_39 : f32 to vector<16x1xf32>
    %79 = arith.divf %77, %78 : vector<16x1xf32>
    %cst_40 = arith.constant 9.99999996E-13 : f32
    %80 = vector.broadcast %cst_40 : f32 to vector<16x1xf32>
    %81 = arith.addf %79, %80 : vector<16x1xf32>
    %82 = math.rsqrt %81 : vector<16x1xf32>
    %83 = vector.broadcast %72 : vector<16x1xf32> to vector<16x256xf32>
    %84 = arith.subf %66, %83 : vector<16x256xf32>
    %85 = vector.broadcast %82 : vector<16x1xf32> to vector<16x256xf32>
    %86 = arith.mulf %84, %85 : vector<16x256xf32>
    %87 = vector.broadcast %67 : vector<1x256xf32> to vector<16x256xf32>
    %88 = arith.mulf %86, %87 : vector<16x256xf32>
    %89 = vector.broadcast %68 : vector<1x256xf32> to vector<16x256xf32>
    %90 = arith.addf %88, %89 : vector<16x256xf32>
    %91 = arith.truncf %90 : vector<16x256xf32> to vector<16x256xbf16>
    %c0_41 = arith.constant 0 : index
    %c0_42 = arith.constant 0 : index
    %92 = vector.load %arg14[%c0_41, %c0_42] : memref<256x32xbf16, #tpu.memory_space<vmem>>, vector<256x32xbf16>
    %cst_43 = arith.constant dense<0.000000e+00> : vector<16x32xf32>
    %93 = tpu.matmul %91, %92, %cst_43 {dimension_numbers = #tpu.dot_dimension_numbers<[1], [0], [0], [1], [0, 0, 1, 1], [], []>} : vector<16x256xbf16>, vector<256x32xbf16>, vector<16x32xf32> -> vector<16x32xf32>
    %c0_44 = arith.constant 0 : index
    %c0_45 = arith.constant 0 : index
    %94 = vector.load %arg15[%c0_44, %c0_45] : memref<1x32xf32, #tpu.memory_space<vmem>>, vector<1x32xf32>
    %95 = vector.broadcast %94 : vector<1x32xf32> to vector<16x32xf32>
    %96 = arith.addf %93, %95 : vector<16x32xf32>
    %c0_46 = arith.constant 0 : index
    %c0_47 = arith.constant 0 : index
    %97 = vector.load %arg16[%c0_46, %c0_47] : memref<16x32xf32, #tpu.memory_space<vmem>>, vector<16x32xf32>
    tpu.vector_store %arg16[%c0_46, %c0_47], %96 {strides = array<i32>} : memref<16x32xf32, #tpu.memory_space<vmem>>, vector<16x32xf32>,
    %c0_48 = arith.constant 0 : index
    %c0_49 = arith.constant 0 : index
    %98 = vector.load %arg17[%c0_48, %c0_49] : memref<16x16xf32, #tpu.memory_space<vmem>>, vector<16x16xf32>
    tpu.vector_store %arg17[%c0_48, %c0_49], %45 {strides = array<i32>} : memref<16x16xf32, #tpu.memory_space<vmem>>, vector<16x16xf32>,
    return
  }
  func.func @transform_0(%arg0: i32) -> i32 {
    %c0_i32 = arith.constant 0 : i32
    %c0_i32_0 = arith.constant 0 : i32
    return %c0_i32 : i32
  }
  func.func @transform_1(%arg0: i32) -> (i32, i32) {
    %c0_i32 = arith.constant 0 : i32
    %c0_i32_0 = arith.constant 0 : i32
    return %arg0, %c0_i32 : i32, i32
  }
  func.func @transform_2(%arg0: i32) -> (i32, i32) {
    %c0_i32 = arith.constant 0 : i32
    %c0_i32_0 = arith.constant 0 : i32
    return %arg0, %c0_i32 : i32, i32
  }
  func.func @transform_3(%arg0: i32) -> (i32, i32) {
    %c0_i32 = arith.constant 0 : i32
    %c0_i32_0 = arith.constant 0 : i32
    %c0_i32_1 = arith.constant 0 : i32
    return %c0_i32, %c0_i32_0 : i32, i32
  }
  func.func @transform_4(%arg0: i32) -> (i32, i32) {
    %c0_i32 = arith.constant 0 : i32
    %c0_i32_0 = arith.constant 0 : i32
    %c0_i32_1 = arith.constant 0 : i32
    return %c0_i32, %c0_i32_0 : i32, i32
  }
  func.func @transform_5(%arg0: i32) -> (i32, i32) {
    %c0_i32 = arith.constant 0 : i32
    %c0_i32_0 = arith.constant 0 : i32
    %c0_i32_1 = arith.constant 0 : i32
    return %c0_i32, %c0_i32_0 : i32, i32
  }
  func.func @transform_6(%arg0: i32) -> (i32, i32) {
    %c0_i32 = arith.constant 0 : i32
    %c0_i32_0 = arith.constant 0 : i32
    %c0_i32_1 = arith.constant 0 : i32
    return %c0_i32, %c0_i32_0 : i32, i32
  }
  func.func @transform_7(%arg0: i32) -> (i32, i32) {
    %c0_i32 = arith.constant 0 : i32
    %c0_i32_0 = arith.constant 0 : i32
    %c0_i32_1 = arith.constant 0 : i32
    return %c0_i32, %c0_i32_0 : i32, i32
  }
  func.func @transform_8(%arg0: i32) -> (i32, i32) {
    %c0_i32 = arith.constant 0 : i32
    %c0_i32_0 = arith.constant 0 : i32
    %c0_i32_1 = arith.constant 0 : i32
    return %c0_i32, %c0_i32_0 : i32, i32
  }
  func.func @transform_9(%arg0: i32) -> (i32, i32) {
    %c0_i32 = arith.constant 0 : i32
    %c0_i32_0 = arith.constant 0 : i32
    %c0_i32_1 = arith.constant 0 : i32
    return %c0_i32, %c0_i32_0 : i32, i32
  }
  func.func @transform_10(%arg0: i32) -> (i32, i32) {
    %c0_i32 = arith.constant 0 : i32
    %c0_i32_0 = arith.constant 0 : i32
    %c0_i32_1 = arith.constant 0 : i32
    return %c0_i32, %c0_i32_0 : i32, i32
  }
  func.func @transform_11(%arg0: i32) -> (i32, i32) {
    %c0_i32 = arith.constant 0 : i32
    %c0_i32_0 = arith.constant 0 : i32
    %c0_i32_1 = arith.constant 0 : i32
    return %c0_i32, %c0_i32_0 : i32, i32
  }
  func.func @transform_12(%arg0: i32) -> (i32, i32) {
    %c0_i32 = arith.constant 0 : i32
    %c0_i32_0 = arith.constant 0 : i32
    %c0_i32_1 = arith.constant 0 : i32
    return %c0_i32, %c0_i32_0 : i32, i32
  }
  func.func @transform_13(%arg0: i32) -> (i32, i32) {
    %c0_i32 = arith.constant 0 : i32
    %c0_i32_0 = arith.constant 0 : i32
    %c0_i32_1 = arith.constant 0 : i32
    return %c0_i32, %c0_i32_0 : i32, i32
  }
  func.func @transform_14(%arg0: i32) -> (i32, i32) {
    %c0_i32 = arith.constant 0 : i32
    %c0_i32_0 = arith.constant 0 : i32
    %c0_i32_1 = arith.constant 0 : i32
    return %c0_i32, %c0_i32_0 : i32, i32
  }
  func.func @transform_15(%arg0: i32) -> (i32, i32) {
    %c0_i32 = arith.constant 0 : i32
    %c0_i32_0 = arith.constant 0 : i32
    return %arg0, %c0_i32 : i32, i32
  }
  func.func @transform_16(%arg0: i32) -> (i32, i32) {
    %c0_i32 = arith.constant 0 : i32
    %c0_i32_0 = arith.constant 0 : i32
    return %arg0, %c0_i32 : i32, i32
  }
}

</mosaic_0001>

<llo_original>
// kernel: _vae_call.1
$region0: #{_vae_call.1}
  #allocation0 [shape = 'u32[]', space=smem, size = 0x4, offset = 0x4, fixed_abs, tag = 'smem constant byte address 0x4 - core index']
  #allocation1 [shape = 'u32[72,128]{1,0:T(1,128)}', space=vmem, size = 0x9000, scoped, tag = 'internal scratch']
  %s0 = inlined_call_operand.vmem [shape: f32[2], index: 0, kind: input, shape index: {}]
  %s1 = inlined_call_operand.vmem [shape: f32[16,32], index: 1, kind: input, shape index: {}]
  %s2 = inlined_call_operand.vmem [shape: f32[16,8], index: 2, kind: input, shape index: {}]
  %s3 = inlined_call_operand.vmem [shape: bf16[32,256], index: 3, kind: input, shape index: {}]
  %s4 = inlined_call_operand.vmem [shape: f32[1,256], index: 4, kind: input, shape index: {}]
  %s5 = inlined_call_operand.vmem [shape: f32[1,256], index: 5, kind: input, shape index: {}]
  %s6 = inlined_call_operand.vmem [shape: f32[1,256], index: 6, kind: input, shape index: {}]
  %s7 = inlined_call_operand.vmem [shape: bf16[256,16], index: 7, kind: input, shape index: {}]
  %s8 = inlined_call_operand.vmem [shape: f32[1,16], index: 8, kind: input, shape index: {}]
  %s9 = inlined_call_operand.vmem [shape: bf16[8,256], index: 9, kind: input, shape index: {}]
  %s10 = inlined_call_operand.vmem [shape: f32[1,256], index: 10, kind: input, shape index: {}]
  %s11 = inlined_call_operand.vmem [shape: f32[1,256], index: 11, kind: input, shape index: {}]
  %s12 = inlined_call_operand.vmem [shape: f32[1,256], index: 12, kind: input, shape index: {}]
  %s13 = inlined_call_operand.vmem [shape: bf16[256,32], index: 13, kind: input, shape index: {}]
  %s14 = inlined_call_operand.vmem [shape: f32[1,32], index: 14, kind: input, shape index: {}]
  %s15 = inlined_call_operand.hbm [shape: f32[16,32], index: 15, kind: output, shape index: {0}]
  %s16 = inlined_call_operand.hbm [shape: f32[16,16], index: 16, kind: output, shape index: {1}]
  %17 = xla_tuple %s15, %s16
  %s18 = sld [smem:[#allocation0]]
  $region82: #{_vae_call.1} parent=0
    _
  %s20 = ssub.s32 1, %s18
  %s21 = scalar_select 0, %s20, %s18
  $region1: #{_vae_call.1} parent=0
    #allocation2 [shape = 'u8[512]{0}', space=smem, size = 0x200, scoped, tag = 'input window, operand 0, single buffered']
    #allocation3 [shape = 's32[1]{0}', space=sflag, size = 0x4, scoped, tag = 'scoped memory for _vae_call.1']
    #allocation4 [shape = 's32[1]{0}', space=sflag, size = 0x4, scoped, tag = 'scoped memory for _vae_call.1']
    #allocation5 [shape = 'u8[8192]{0}', space=vmem, size = 0x2000, scoped, tag = 'output window, operand 0, single buffered']
    #allocation6 [shape = 'u8[8192]{0}', space=vmem, size = 0x2000, scoped, tag = 'output window, operand 1, single buffered']
    #allocation7 [shape = 's32[1]{0}', space=sflag, size = 0x4, scoped, tag = 'scoped memory for _vae_call.1']
    %22 = vsyncpa [#allocation4], 0
    %23 = vsyncpa [#allocation3], 0
    %24 = vsyncpa [#allocation7], 0
    // Predicated region
    $region2: #{_vae_call.1} parent=1 // pred_check
      _
    $region3: #{_vae_call.1} parent=1 // pred_check_branch
      %26 = sbr.rel (0) target = $region5
    $region4: #{_vae_call.1} parent=1 // pred_region
      %28 = vsyncadd [#allocation4], 0
      %s30 = sshll.u32 %s0, 4
      %s31 = int_to_ptr.vmem [resolvable:$true] %s30
      %33 = dma.vmem_to_smem %s31, 16, [#allocation2], [#allocation4]
    $region5: #{_vae_call.1} parent=1 // pred_fallthru
      _
    // Predicated region
    $region6: #{_vae_call.1} parent=1 // pred_check
      _
    $region7: #{_vae_call.1} parent=1 // pred_check_branch
      %35 = sbr.rel (0) target = $region9
    $region8: #{_vae_call.1} parent=1 // pred_region
      _
    $region9: #{_vae_call.1} parent=1 // pred_fallthru
      _
    // Predicated region
    $region10: #{_vae_call.1} parent=1 // pred_check
      _
    $region11: #{_vae_call.1} parent=1 // pred_check_branch
      %37 = sbr.rel (0) target = $region13
    $region12: #{_vae_call.1} parent=1 // pred_region
      _
    $region13: #{_vae_call.1} parent=1 // pred_fallthru
      _
    // Predicated region
    $region14: #{_vae_call.1} parent=1 // pred_check
      _
    $region15: #{_vae_call.1} parent=1 // pred_check_branch
      %39 = sbr.rel (0) target = $region17
    $region16: #{_vae_call.1} parent=1 // pred_region
      _
    $region17: #{_vae_call.1} parent=1 // pred_fallthru
      _
    // Predicated region
    $region18: #{_vae_call.1} parent=1 // pred_check
      _
    $region19: #{_vae_call.1} parent=1 // pred_check_branch
      %41 = sbr.rel (0) target = $region21
    $region20: #{_vae_call.1} parent=1 // pred_region
      _
    $region21: #{_vae_call.1} parent=1 // pred_fallthru
      _
    // Predicated region
    $region22: #{_vae_call.1} parent=1 // pred_check
      _
    $region23: #{_vae_call.1} parent=1 // pred_check_branch
      %43 = sbr.rel (0) target = $region25
    $region24: #{_vae_call.1} parent=1 // pred_region
      _
    $region25: #{_vae_call.1} parent=1 // pred_fallthru
      _
    // Predicated region
    $region26: #{_vae_call.1} parent=1 // pred_check
      _
    $region27: #{_vae_call.1} parent=1 // pred_check_branch
      %45 = sbr.rel (0) target = $region29
    $region28: #{_vae_call.1} parent=1 // pred_region
      _
    $region29: #{_vae_call.1} parent=1 // pred_fallthru
      _
    // Predicated region
    $region30: #{_vae_call.1} parent=1 // pred_check
      _
    $region31: #{_vae_call.1} parent=1 // pred_check_branch
      %47 = sbr.rel (0) target = $region33
    $region32: #{_vae_call.1} parent=1 // pred_region
      _
    $region33: #{_vae_call.1} parent=1 // pred_fallthru
      _
    // Predicated region
    $region34: #{_vae_call.1} parent=1 // pred_check
      _
    $region35: #{_vae_call.1} parent=1 // pred_check_branch
      %49 = sbr.rel (0) target = $region37
    $region36: #{_vae_call.1} parent=1 // pred_region
      _
    $region37: #{_vae_call.1} parent=1 // pred_fallthru
      _
    // Predicated region
    $region38: #{_vae_call.1} parent=1 // pred_check
      _
    $region39: #{_vae_call.1} parent=1 // pred_check_branch
      %51 = sbr.rel (0) target = $region41
    $region40: #{_vae_call.1} parent=1 // pred_region
      _
    $region41: #{_vae_call.1} parent=1 // pred_fallthru
      _
    // Predicated region
    $region42: #{_vae_call.1} parent=1 // pred_check
      _
    $region43: #{_vae_call.1} parent=1 // pred_check_branch
      %53 = sbr.rel (0) target = $region45
    $region44: #{_vae_call.1} parent=1 // pred_region
      _
    $region45: #{_vae_call.1} parent=1 // pred_fallthru
      _
    // Predicated region
    $region46: #{_vae_call.1} parent=1 // pred_check
      _
    $region47: #{_vae_call.1} parent=1 // pred_check_branch
      %55 = sbr.rel (0) target = $region49
    $region48: #{_vae_call.1} parent=1 // pred_region
      _
    $region49: #{_vae_call.1} parent=1 // pred_fallthru
      _
    // Predicated region
    $region50: #{_vae_call.1} parent=1 // pred_check
      _
    $region51: #{_vae_call.1} parent=1 // pred_check_branch
      %57 = sbr.rel (0) target = $region53
    $region52: #{_vae_call.1} parent=1 // pred_region
      _
    $region53: #{_vae_call.1} parent=1 // pred_fallthru
      _
    // Predicated region
    $region54: #{_vae_call.1} parent=1 // pred_check
      _
    $region55: #{_vae_call.1} parent=1 // pred_check_branch
      %59 = sbr.rel (0) target = $region57
    $region56: #{_vae_call.1} parent=1 // pred_region
      _
    $region57: #{_vae_call.1} parent=1 // pred_fallthru
      _
    // Predicated region
    $region58: #{_vae_call.1} parent=1 // pred_check
      _
    $region59: #{_vae_call.1} parent=1 // pred_check_branch
      %61 = sbr.rel (0) target = $region61
    $region60: #{_vae_call.1} parent=1 // pred_region
      _
    $region61: #{_vae_call.1} parent=1 // pred_fallthru
      _
    // Predicated region
    $region62: #{_vae_call.1} parent=1 // pred_check
      _
    $region63: #{_vae_call.1} parent=1 // pred_check_branch
      %63 = sbr.rel (0) target = $region65
    $region64: #{_vae_call.1} parent=1 // pred_region
      %65 = dma.done [#allocation4], 16
    $region65: #{_vae_call.1} parent=1 // pred_fallthru
      _
    %66 = sfence
    %s68 = sld [smem:[#allocation2]]
    %s69 = sld [smem:[#allocation2 + $0x1]]
    %v70 = vld [vmem:[%s1] sm:$0xff]
    %v71 = vld [vmem:[%s1 + $0x8] sm:$0xff]
    %v72 = vpack.c.bf16 %v71, %v70
    %v73 = vld [vmem:[%s3] sm:$0xff]
    %v74 = vld [vmem:[%s3 + $0x8] sm:$0xff]
    %v75 = vld [vmem:[%s3 + $0x10] sm:$0xff]
    %v76 = vld [vmem:[%s3 + $0x18] sm:$0xff]
    %v77 = vld [vmem:[%s4] sm:$0x3]
    %v79 = vperm.slane %v77, 0
    %v80 = vperm.slane %v77, 1
    %v87 = vunpack.c.l.b16 %v73
    %v88 = vunpack.c.h.b16 %v73
    %v89 = vunpack.c.l.b16 %v74
    %v90 = vunpack.c.h.b16 %v74
    %v91 = vunpack.c.l.b16 %v75
    %v92 = vunpack.c.h.b16 %v75
    %v93 = vunpack.c.l.b16 %v76
    %v94 = vunpack.c.h.b16 %v76
    %v95 = vpack.c.b16 %v89, %v87
    %v96 = vpack.c.b16 %v90, %v88
    %v97 = vpack.c.b16 %v93, %v91
    %v98 = vpack.c.b16 %v94, %v92
    %vm103 = vcmask 261120
    %v105 = vsel %vm103, %v72, 0
    %107 = vmatpush.bf16.msra.mxu0 0
    %108 = vmatpush.bf16.msra.mxu0 0
    %109 = vmatpush.bf16.msra.mxu0 0
    %110 = vmatpush.bf16.msra.mxu0 0
    %111 = vmatpush.bf16.msra.mxu0 0
    %112 = vmatpush.bf16.msra.mxu0 0
    %113 = vmatpush.bf16.msra.mxu0 %v97
    %114 = vmatpush.bf16.msra.mxu0 %v95
    %115 = vmatmul.bf16.gmra.mxu0 %v105
    %v116 = vpop.f32.mrf.mxu0
    %v117 = vadd.f32 %v79, %v116
    %v118 = vpop.f32.mrf.mxu0
    %v119 = vadd.f32 %v79, %v118
    %120 = vdwg.mxu0
    %121 = vmatpush.bf16.msra.mxu0 0
    %122 = vmatpush.bf16.msra.mxu0 0
    %123 = vmatpush.bf16.msra.mxu0 0
    %124 = vmatpush.bf16.msra.mxu0 0
    %125 = vmatpush.bf16.msra.mxu0 0
    %126 = vmatpush.bf16.msra.mxu0 0
    %127 = vmatpush.bf16.msra.mxu0 %v98
    %128 = vmatpush.bf16.msra.mxu0 %v96
    %129 = vmatmul.bf16.gmra.mxu0 %v105
    %v130 = vpop.f32.mrf.mxu0
    %v131 = vadd.f32 %v80, %v130
    %v132 = vpop.f32.mrf.mxu0
    %v133 = vadd.f32 %v80, %v132
    %134 = vdwg.mxu0
    %v135 = vmax.f32 %v117, 0.0
    %v136 = vmax.f32 %v131, 0.0
    %v137 = vmax.f32 %v119, 0.0
    %v138 = vmax.f32 %v133, 0.0
    %v139 = vmin.f32 %v117, 0.0
    %v140 = vmin.f32 %v131, 0.0
    %v141 = vmin.f32 %v119, 0.0
    %v142 = vmin.f32 %v133, 0.0
    %v143 = vstv %s68
    %v144 = vmul.f32 %v143, %v139
    %v145 = vmul.f32 %v143, %v140
    %v146 = vmul.f32 %v143, %v141
    %v147 = vmul.f32 %v143, %v142
    %v148 = vadd.f32 %v135, %v144
    %v149 = vadd.f32 %v136, %v145
    %v150 = vadd.f32 %v137, %v146
    %v151 = vadd.f32 %v138, %v147
    %v152 = vld [vmem:[%s5] sm:$0x3]
    %v153 = vld [vmem:[%s6] sm:$0x3]
    %v154 = vadd.f32 %v148, %v149
    %155 = vadd.xlane.f32.xlu0 %v154
    %v156 = vpop.xlane.xlu0 %155
    %v157 = vadd.f32 %v150, %v151
    %158 = vadd.xlane.f32.xlu0 %v157
    %v159 = vpop.xlane.xlu0 %158
    %v160 = vrcp.pop 256.0
    %v161 = vmul.f32 256.0, %v160
    %v162 = vsub.f32 1.0, %v161
    %v163 = vmul.f32 %v160, %v162
    %v164 = vadd.f32 %v160, %v163
    %vm165 = vweird.f32 %v160
    %v166 = vsel %vm165, %v160, %v164
    %v167 = vmul.f32 %v156, %v166
    %v168 = vmul.f32 %v159, %v166
    %v169 = vsub.f32 %v148, %v167
    %v170 = vsub.f32 %v149, %v167
    %v171 = vsub.f32 %v150, %v168
    %v172 = vsub.f32 %v151, %v168
    %v173 = vmul.f32 %v169, %v169
    %v174 = vmul.f32 %v170, %v170
    %v175 = vmul.f32 %v171, %v171
    %v176 = vmul.f32 %v172, %v172
    %v177 = vadd.f32 %v173, %v174
    %178 = vadd.xlane.f32.xlu0 %v177
    %v179 = vpop.xlane.xlu0 %178
    %v180 = vadd.f32 %v175, %v176
    %181 = vadd.xlane.f32.xlu0 %v180
    %v182 = vpop.xlane.xlu0 %181
    %v183 = vmul.f32 %v179, %v166
    %v184 = vmul.f32 %v182, %v166
    %v185 = vadd.f32 %v183, 1e-12
    %v186 = vadd.f32 %v184, 1e-12
    %v187 = vrsqrt.pop %v185
    %v188 = vmul.f32 %v187, %v185
    %v189 = vmul.f32 %v188, %v187
    %v190 = vmul.f32 0.5, %v189
    %v191 = vsub.f32 1.5, %v190
    %v192 = vmul.f32 %v187, %v191
    %vm193 = vweird.f32 %v185
    %vm194 = vweird.f32 %v187
    %vm195 = vmor %vm193, %vm194
    %v196 = vsel %vm195, %v187, %v192
    %v197 = vrsqrt.pop %v186
    %v198 = vmul.f32 %v197, %v186
    %v199 = vmul.f32 %v198, %v197
    %v200 = vmul.f32 0.5, %v199
    %v201 = vsub.f32 1.5, %v200
    %v202 = vmul.f32 %v197, %v201
    %vm203 = vweird.f32 %v186
    %vm204 = vweird.f32 %v197
    %vm205 = vmor %vm203, %vm204
    %v206 = vsel %vm205, %v197, %v202
    %v207 = vmul.f32 %v169, %v196
    %v208 = vmul.f32 %v170, %v196
    %v209 = vmul.f32 %v171, %v206
    %v210 = vmul.f32 %v172, %v206
    %v212 = vperm.slane %v152, 0
    %v213 = vperm.slane %v152, 1
    %v216 = vmul.f32 %v207, %v212
    %v217 = vmul.f32 %v208, %v213
    %v218 = vmul.f32 %v209, %v212
    %v219 = vmul.f32 %v210, %v213
    %v221 = vperm.slane %v153, 0
    %v222 = vperm.slane %v153, 1
    %v225 = vadd.f32 %v216, %v221
    %v226 = vadd.f32 %v217, %v222
    %v227 = vadd.f32 %v218, %v221
    %v228 = vadd.f32 %v219, %v222
    %v229 = vpack.c.bf16 %v227, %v225
    %v230 = vpack.c.bf16 %v228, %v226
    %v231 = vld [vmem:[%s7] sm:$0xf]
    %v232 = vld [vmem:[%s7 + $0x4] sm:$0xf]
    %v233 = vld [vmem:[%s7 + $0x8] sm:$0xf]
    %v234 = vld [vmem:[%s7 + $0xc] sm:$0xf]
    %v235 = vld [vmem:[%s7 + $0x10] sm:$0xf]
    %v236 = vld [vmem:[%s7 + $0x14] sm:$0xf]
    %v237 = vld [vmem:[%s7 + $0x18] sm:$0xf]
    %v238 = vld [vmem:[%s7 + $0x1c] sm:$0xf]
    %v239 = vld [vmem:[%s7 + $0x20] sm:$0xf]
    %v240 = vld [vmem:[%s7 + $0x24] sm:$0xf]
    %v241 = vld [vmem:[%s7 + $0x28] sm:$0xf]
    %v242 = vld [vmem:[%s7 + $0x2c] sm:$0xf]
    %v243 = vld [vmem:[%s7 + $0x30] sm:$0xf]
    %v244 = vld [vmem:[%s7 + $0x34] sm:$0xf]
    %v245 = vld [vmem:[%s7 + $0x38] sm:$0xf]
    %v246 = vld [vmem:[%s7 + $0x3c] sm:$0xf]
    %v247 = vld [vmem:[%s7 + $0x40] sm:$0xf]
    %v248 = vld [vmem:[%s7 + $0x44] sm:$0xf]
    %v249 = vld [vmem:[%s7 + $0x48] sm:$0xf]
    %v250 = vld [vmem:[%s7 + $0x4c] sm:$0xf]
    %v251 = vld [vmem:[%s7 + $0x50] sm:$0xf]
    %v252 = vld [vmem:[%s7 + $0x54] sm:$0xf]
    %v253 = vld [vmem:[%s7 + $0x58] sm:$0xf]
    %v254 = vld [vmem:[%s7 + $0x5c] sm:$0xf]
    %v255 = vld [vmem:[%s7 + $0x60] sm:$0xf]
    %v256 = vld [vmem:[%s7 + $0x64] sm:$0xf]
    %v257 = vld [vmem:[%s7 + $0x68] sm:$0xf]
    %v258 = vld [vmem:[%s7 + $0x6c] sm:$0xf]
    %v259 = vld [vmem:[%s7 + $0x70] sm:$0xf]
    %v260 = vld [vmem:[%s7 + $0x74] sm:$0xf]
    %v261 = vld [vmem:[%s7 + $0x78] sm:$0xf]
    %v262 = vld [vmem:[%s7 + $0x7c] sm:$0xf]
    %v263 = vld [vmem:[%s8] sm:$0x1]
    %v265 = vperm.slane %v263, 0
    %v299 = vunpack.c.l.b16 %v231
    %v300 = vunpack.c.l.b16 %v232
    %v301 = vunpack.c.l.b16 %v233
    %v302 = vunpack.c.l.b16 %v234
    %v303 = vunpack.c.l.b16 %v235
    %v304 = vunpack.c.l.b16 %v236
    %v305 = vunpack.c.l.b16 %v237
    %v306 = vunpack.c.l.b16 %v238
    %v307 = vunpack.c.l.b16 %v239
    %v308 = vunpack.c.l.b16 %v240
    %v309 = vunpack.c.l.b16 %v241
    %v310 = vunpack.c.l.b16 %v242
    %v311 = vunpack.c.l.b16 %v243
    %v312 = vunpack.c.l.b16 %v244
    %v313 = vunpack.c.l.b16 %v245
    %v314 = vunpack.c.l.b16 %v246
    %v315 = vunpack.c.l.b16 %v247
    %v316 = vunpack.c.l.b16 %v248
    %v317 = vunpack.c.l.b16 %v249
    %v318 = vunpack.c.l.b16 %v250
    %v319 = vunpack.c.l.b16 %v251
    %v320 = vunpack.c.l.b16 %v252
    %v321 = vunpack.c.l.b16 %v253
    %v322 = vunpack.c.l.b16 %v254
    %v323 = vunpack.c.l.b16 %v255
    %v324 = vunpack.c.l.b16 %v256
    %v325 = vunpack.c.l.b16 %v257
    %v326 = vunpack.c.l.b16 %v258
    %v327 = vunpack.c.l.b16 %v259
    %v328 = vunpack.c.l.b16 %v260
    %v329 = vunpack.c.l.b16 %v261
    %v330 = vunpack.c.l.b16 %v262
    %v331 = vpack.c.b16 %v300, %v299
    %v332 = vpack.c.b16 %v302, %v301
    %v333 = vpack.c.b16 %v304, %v303
    %v334 = vpack.c.b16 %v306, %v305
    %v335 = vpack.c.b16 %v308, %v307
    %v336 = vpack.c.b16 %v310, %v309
    %v337 = vpack.c.b16 %v312, %v311
    %v338 = vpack.c.b16 %v314, %v313
    %v339 = vpack.c.b16 %v316, %v315
    %v340 = vpack.c.b16 %v318, %v317
    %v341 = vpack.c.b16 %v320, %v319
    %v342 = vpack.c.b16 %v322, %v321
    %v343 = vpack.c.b16 %v324, %v323
    %v344 = vpack.c.b16 %v326, %v325
    %v345 = vpack.c.b16 %v328, %v327
    %v346 = vpack.c.b16 %v330, %v329
    %363 = vmatpush.bf16.msra.mxu0 %v338
    %364 = vmatpush.bf16.msra.mxu0 %v337
    %365 = vmatpush.bf16.msra.mxu0 %v336
    %366 = vmatpush.bf16.msra.mxu0 %v335
    %367 = vmatpush.bf16.msra.mxu0 %v334
    %368 = vmatpush.bf16.msra.mxu0 %v333
    %369 = vmatpush.bf16.msra.mxu0 %v332
    %370 = vmatpush.bf16.msra.mxu0 %v331
    %371 = vmatmul.bf16.gmra.mxu0 %v229
    %v372 = vpop.f32.mrf.mxu0
    %v373 = vadd.f32 %v265, %v372
    %v374 = vpop.f32.mrf.mxu0
    %v375 = vadd.f32 %v265, %v374
    %376 = vdwg.mxu0
    %377 = vmatpush.bf16.msra.mxu0 %v346
    %378 = vmatpush.bf16.msra.mxu0 %v345
    %379 = vmatpush.bf16.msra.mxu0 %v344
    %380 = vmatpush.bf16.msra.mxu0 %v343
    %381 = vmatpush.bf16.msra.mxu0 %v342
    %382 = vmatpush.bf16.msra.mxu0 %v341
    %383 = vmatpush.bf16.msra.mxu0 %v340
    %384 = vmatpush.bf16.msra.mxu0 %v339
    %385 = vmatmul.bf16.gmra.mxu0 %v230
    %v386 = vpop.f32.mrf.mxu0
    %v387 = vadd.f32 %v373, %v386
    %v388 = vpop.f32.mrf.mxu0
    %v389 = vadd.f32 %v375, %v388
    %390 = vdwg.mxu0
    %v391 = vld [vmem:[%s2] sm:$0xff]
    %v392 = vld [vmem:[%s2 + $0x8] sm:$0xff]
    %v393 = vmul.f32 %v387, 0.5
    %v394 = vmul.f32 %v389, 0.5
    %v395 = vmul.f32 %v393, 1.442695
    %v396 = vpow.pop %v395
    %v397 = vmul.f32 %v394, 1.442695
    %v398 = vpow.pop %v397
    %401 = vrot.lane.b32.xlu0 %v396, 120
    %v402 = vpop.permute.xlu0 %401
    %403 = vrot.lane.b32.xlu0 %v398, 120
    %v404 = vpop.permute.xlu0 %403
    %v407 = vmul.f32 %v391, %v402
    %v408 = vmul.f32 %v392, %v404
    %v409 = vadd.f32 %v387, %v407
    %v410 = vadd.f32 %v389, %v408
    %v411 = vpack.c.bf16 %v410, %v409
    %v412 = vld [vmem:[%s9] sm:$0xff]
    %v413 = vld [vmem:[%s10] sm:$0x3]
    %v415 = vperm.slane %v413, 0
    %v416 = vperm.slane %v413, 1
    %v420 = vunpack.c.l.b16 %v412
    %v421 = vunpack.c.h.b16 %v412
    %v422 = vpack.c.b16 %v420, %v420
    %v423 = vpack.c.b16 %v421, %v421
    %vm424 = vcmask 64512
    %v426 = vsel %vm424, %v411, 0
    %vm428 = vcmask 1043456
    %v430 = vsel %vm428, %v422, 0
    %v433 = vsel %vm428, %v423, 0
    %435 = vmatpush.bf16.msra.mxu0 0
    %436 = vmatpush.bf16.msra.mxu0 0
    %437 = vmatpush.bf16.msra.mxu0 0
    %438 = vmatpush.bf16.msra.mxu0 0
    %439 = vmatpush.bf16.msra.mxu0 0
    %440 = vmatpush.bf16.msra.mxu0 0
    %441 = vmatpush.bf16.msra.mxu0 0
    %442 = vmatpush.bf16.msra.mxu0 %v430
    %443 = vmatmul.bf16.gmra.mxu0 %v426
    %v444 = vpop.f32.mrf.mxu0
    %v445 = vadd.f32 %v415, %v444
    %v446 = vpop.f32.mrf.mxu0
    %v447 = vadd.f32 %v415, %v446
    %448 = vdwg.mxu0
    %449 = vmatpush.bf16.msra.mxu0 0
    %450 = vmatpush.bf16.msra.mxu0 0
    %451 = vmatpush.bf16.msra.mxu0 0
    %452 = vmatpush.bf16.msra.mxu0 0
    %453 = vmatpush.bf16.msra.mxu0 0
    %454 = vmatpush.bf16.msra.mxu0 0
    %455 = vmatpush.bf16.msra.mxu0 0
    %456 = vmatpush.bf16.msra.mxu0 %v433
    %457 = vmatmul.bf16.gmra.mxu0 %v426
    %v458 = vpop.f32.mrf.mxu0
    %v459 = vadd.f32 %v416, %v458
    %v460 = vpop.f32.mrf.mxu0
    %v461 = vadd.f32 %v416, %v460
    %462 = vdwg.mxu0
    %v463 = vmax.f32 %v445, 0.0
    %v464 = vmax.f32 %v459, 0.0
    %v465 = vmax.f32 %v447, 0.0
    %v466 = vmax.f32 %v461, 0.0
    %v467 = vmin.f32 %v445, 0.0
    %v468 = vmin.f32 %v459, 0.0
    %v469 = vmin.f32 %v447, 0.0
    %v470 = vmin.f32 %v461, 0.0
    %v471 = vstv %s69
    %v472 = vmul.f32 %v471, %v467
    %v473 = vmul.f32 %v471, %v468
    %v474 = vmul.f32 %v471, %v469
    %v475 = vmul.f32 %v471, %v470
    %v476 = vadd.f32 %v463, %v472
    %v477 = vadd.f32 %v464, %v473
    %v478 = vadd.f32 %v465, %v474
    %v479 = vadd.f32 %v466, %v475
    %v480 = vld [vmem:[%s11] sm:$0x3]
    %v481 = vld [vmem:[%s12] sm:$0x3]
    %v482 = vadd.f32 %v476, %v477
    %483 = vadd.xlane.f32.xlu0 %v482
    %v484 = vpop.xlane.xlu0 %483
    %v485 = vadd.f32 %v478, %v479
    %486 = vadd.xlane.f32.xlu0 %v485
    %v487 = vpop.xlane.xlu0 %486
    %v488 = vmul.f32 %v484, %v166
    %v489 = vmul.f32 %v487, %v166
    %v490 = vsub.f32 %v476, %v488
    %v491 = vsub.f32 %v477, %v488
    %v492 = vsub.f32 %v478, %v489
    %v493 = vsub.f32 %v479, %v489
    %v494 = vmul.f32 %v490, %v490
    %v495 = vmul.f32 %v491, %v491
    %v496 = vmul.f32 %v492, %v492
    %v497 = vmul.f32 %v493, %v493
    %v498 = vadd.f32 %v494, %v495
    %499 = vadd.xlane.f32.xlu0 %v498
    %v500 = vpop.xlane.xlu0 %499
    %v501 = vadd.f32 %v496, %v497
    %502 = vadd.xlane.f32.xlu0 %v501
    %v503 = vpop.xlane.xlu0 %502
    %v504 = vmul.f32 %v500, %v166
    %v505 = vmul.f32 %v503, %v166
    %v506 = vadd.f32 %v504, 1e-12
    %v507 = vadd.f32 %v505, 1e-12
    %v508 = vrsqrt.pop %v506
    %v509 = vmul.f32 %v508, %v506
    %v510 = vmul.f32 %v509, %v508
    %v511 = vmul.f32 0.5, %v510
    %v512 = vsub.f32 1.5, %v511
    %v513 = vmul.f32 %v508, %v512
    %vm514 = vweird.f32 %v506
    %vm515 = vweird.f32 %v508
    %vm516 = vmor %vm514, %vm515
    %v517 = vsel %vm516, %v508, %v513
    %v518 = vrsqrt.pop %v507
    %v519 = vmul.f32 %v518, %v507
    %v520 = vmul.f32 %v519, %v518
    %v521 = vmul.f32 0.5, %v520
    %v522 = vsub.f32 1.5, %v521
    %v523 = vmul.f32 %v518, %v522
    %vm524 = vweird.f32 %v507
    %vm525 = vweird.f32 %v518
    %vm526 = vmor %vm524, %vm525
    %v527 = vsel %vm526, %v518, %v523
    %v528 = vmul.f32 %v490, %v517
    %v529 = vmul.f32 %v491, %v517
    %v530 = vmul.f32 %v492, %v527
    %v531 = vmul.f32 %v493, %v527
    %v533 = vperm.slane %v480, 0
    %v534 = vperm.slane %v480, 1
    %v537 = vmul.f32 %v528, %v533
    %v538 = vmul.f32 %v529, %v534
    %v539 = vmul.f32 %v530, %v533
    %v540 = vmul.f32 %v531, %v534
    %v542 = vperm.slane %v481, 0
    %v543 = vperm.slane %v481, 1
    %v546 = vadd.f32 %v537, %v542
    %v547 = vadd.f32 %v538, %v543
    %v548 = vadd.f32 %v539, %v542
    %v549 = vadd.f32 %v540, %v543
    %v550 = vpack.c.bf16 %v548, %v546
    %v551 = vpack.c.bf16 %v549, %v547
    %v552 = vld [vmem:[%s13] sm:$0xf]
    %v553 = vld [vmem:[%s13 + $0x4] sm:$0xf]
    %v554 = vld [vmem:[%s13 + $0x8] sm:$0xf]
    %v555 = vld [vmem:[%s13 + $0xc] sm:$0xf]
    %v556 = vld [vmem:[%s13 + $0x10] sm:$0xf]
    %v557 = vld [vmem:[%s13 + $0x14] sm:$0xf]
    %v558 = vld [vmem:[%s13 + $0x18] sm:$0xf]
    %v559 = vld [vmem:[%s13 + $0x1c] sm:$0xf]
    %v560 = vld [vmem:[%s13 + $0x20] sm:$0xf]
    %v561 = vld [vmem:[%s13 + $0x24] sm:$0xf]
    %v562 = vld [vmem:[%s13 + $0x28] sm:$0xf]
    %v563 = vld [vmem:[%s13 + $0x2c] sm:$0xf]
    %v564 = vld [vmem:[%s13 + $0x30] sm:$0xf]
    %v565 = vld [vmem:[%s13 + $0x34] sm:$0xf]
    %v566 = vld [vmem:[%s13 + $0x38] sm:$0xf]
    %v567 = vld [vmem:[%s13 + $0x3c] sm:$0xf]
    %v568 = vld [vmem:[%s13 + $0x40] sm:$0xf]
    %v569 = vld [vmem:[%s13 + $0x44] sm:$0xf]
    %v570 = vld [vmem:[%s13 + $0x48] sm:$0xf]
    %v571 = vld [vmem:[%s13 + $0x4c] sm:$0xf]
    %v572 = vld [vmem:[%s13 + $0x50] sm:$0xf]
    %v573 = vld [vmem:[%s13 + $0x54] sm:$0xf]
    %v574 = vld [vmem:[%s13 + $0x58] sm:$0xf]
    %v575 = vld [vmem:[%s13 + $0x5c] sm:$0xf]
    %v576 = vld [vmem:[%s13 + $0x60] sm:$0xf]
    %v577 = vld [vmem:[%s13 + $0x64] sm:$0xf]
    %v578 = vld [vmem:[%s13 + $0x68] sm:$0xf]
    %v579 = vld [vmem:[%s13 + $0x6c] sm:$0xf]
    %v580 = vld [vmem:[%s13 + $0x70] sm:$0xf]
    %v581 = vld [vmem:[%s13 + $0x74] sm:$0xf]
    %v582 = vld [vmem:[%s13 + $0x78] sm:$0xf]
    %v583 = vld [vmem:[%s13 + $0x7c] sm:$0xf]
    %v584 = vld [vmem:[%s14] sm:$0x1]
    %v586 = vperm.slane %v584, 0
    %v620 = vunpack.c.l.b16 %v552
    %v621 = vunpack.c.l.b16 %v553
    %v622 = vunpack.c.l.b16 %v554
    %v623 = vunpack.c.l.b16 %v555
    %v624 = vunpack.c.l.b16 %v556
    %v625 = vunpack.c.l.b16 %v557
    %v626 = vunpack.c.l.b16 %v558
    %v627 = vunpack.c.l.b16 %v559
    %v628 = vunpack.c.l.b16 %v560
    %v629 = vunpack.c.l.b16 %v561
    %v630 = vunpack.c.l.b16 %v562
    %v631 = vunpack.c.l.b16 %v563
    %v632 = vunpack.c.l.b16 %v564
    %v633 = vunpack.c.l.b16 %v565
    %v634 = vunpack.c.l.b16 %v566
    %v635 = vunpack.c.l.b16 %v567
    %v636 = vunpack.c.l.b16 %v568
    %v637 = vunpack.c.l.b16 %v569
    %v638 = vunpack.c.l.b16 %v570
    %v639 = vunpack.c.l.b16 %v571
    %v640 = vunpack.c.l.b16 %v572
    %v641 = vunpack.c.l.b16 %v573
    %v642 = vunpack.c.l.b16 %v574
    %v643 = vunpack.c.l.b16 %v575
    %v644 = vunpack.c.l.b16 %v576
    %v645 = vunpack.c.l.b16 %v577
    %v646 = vunpack.c.l.b16 %v578
    %v647 = vunpack.c.l.b16 %v579
    %v648 = vunpack.c.l.b16 %v580
    %v649 = vunpack.c.l.b16 %v581
    %v650 = vunpack.c.l.b16 %v582
    %v651 = vunpack.c.l.b16 %v583
    %v652 = vpack.c.b16 %v621, %v620
    %v653 = vpack.c.b16 %v623, %v622
    %v654 = vpack.c.b16 %v625, %v624
    %v655 = vpack.c.b16 %v627, %v626
    %v656 = vpack.c.b16 %v629, %v628
    %v657 = vpack.c.b16 %v631, %v630
    %v658 = vpack.c.b16 %v633, %v632
    %v659 = vpack.c.b16 %v635, %v634
    %v660 = vpack.c.b16 %v637, %v636
    %v661 = vpack.c.b16 %v639, %v638
    %v662 = vpack.c.b16 %v641, %v640
    %v663 = vpack.c.b16 %v643, %v642
    %v664 = vpack.c.b16 %v645, %v644
    %v665 = vpack.c.b16 %v647, %v646
    %v666 = vpack.c.b16 %v649, %v648
    %v667 = vpack.c.b16 %v651, %v650
    %684 = vmatpush.bf16.msra.mxu0 %v659
    %685 = vmatpush.bf16.msra.mxu0 %v658
    %686 = vmatpush.bf16.msra.mxu0 %v657
    %687 = vmatpush.bf16.msra.mxu0 %v656
    %688 = vmatpush.bf16.msra.mxu0 %v655
    %689 = vmatpush.bf16.msra.mxu0 %v654
    %690 = vmatpush.bf16.msra.mxu0 %v653
    %691 = vmatpush.bf16.msra.mxu0 %v652
    %692 = vmatmul.bf16.gmra.mxu0 %v550
    %v693 = vpop.f32.mrf.mxu0
    %v694 = vadd.f32 %v586, %v693
    %v695 = vpop.f32.mrf.mxu0
    %v696 = vadd.f32 %v586, %v695
    %697 = vdwg.mxu0
    %698 = vmatpush.bf16.msra.mxu0 %v667
    %699 = vmatpush.bf16.msra.mxu0 %v666
    %700 = vmatpush.bf16.msra.mxu0 %v665
    %701 = vmatpush.bf16.msra.mxu0 %v664
    %702 = vmatpush.bf16.msra.mxu0 %v663
    %703 = vmatpush.bf16.msra.mxu0 %v662
    %704 = vmatpush.bf16.msra.mxu0 %v661
    %705 = vmatpush.bf16.msra.mxu0 %v660
    %706 = vmatmul.bf16.gmra.mxu0 %v551
    %v707 = vpop.f32.mrf.mxu0
    %v708 = vadd.f32 %v694, %v707
    %v709 = vpop.f32.mrf.mxu0
    %v710 = vadd.f32 %v696, %v709
    %711 = vdwg.mxu0
    %712 = vst.msk [vmem:[#allocation5] sm:$0xff] %vm103, %v708
    %713 = vst.msk [vmem:[#allocation5 + $0x8] sm:$0xff] %vm103, %v710
    %vm714 = vcmask 130048
    %715 = vst.msk [vmem:[#allocation6] sm:$0xff] %vm714, %v387
    %716 = vst.msk [vmem:[#allocation6 + $0x8] sm:$0xff] %vm714, %v389
    // Predicated region
    $region66: #{_vae_call.1} parent=1 // pred_check
      _
    $region67: #{_vae_call.1} parent=1 // pred_check_branch
      %718 = sbr.rel (0) target = $region69
    $region68: #{_vae_call.1} parent=1 // pred_region
      %720 = vsyncadd [#allocation3], 0
      %s721 = sshll.u32 [#allocation5], 4
      %s722 = int_to_ptr.vmem [resolvable:$true] %s721
      %s723 = sshll.u32 %s15, 4
      %s724 = int_to_ptr.hbm [resolvable:$true] %s723
      %729 = dma.vmem_to_hbm [thread:$0]  %s722, 256, %s724, [#allocation3], 128, 128, 8
    $region69: #{_vae_call.1} parent=1 // pred_fallthru
      _
    // Predicated region
    $region70: #{_vae_call.1} parent=1 // pred_check
      _
    $region71: #{_vae_call.1} parent=1 // pred_check_branch
      %731 = sbr.rel (0) target = $region73
    $region72: #{_vae_call.1} parent=1 // pred_region
      %733 = vsyncadd [#allocation7], 0
      %s734 = sshll.u32 [#allocation6], 4
      %s735 = int_to_ptr.vmem [resolvable:$true] %s734
      %s736 = sshll.u32 %s16, 4
      %s737 = int_to_ptr.hbm [resolvable:$true] %s736
      %742 = dma.vmem_to_hbm [thread:$0]  %s735, 256, %s737, [#allocation7], 128, 128, 8
    $region73: #{_vae_call.1} parent=1 // pred_fallthru
      _
    // Predicated region
    $region74: #{_vae_call.1} parent=1 // pred_check
      _
    $region75: #{_vae_call.1} parent=1 // pred_check_branch
      %744 = sbr.rel (0) target = $region77
    $region76: #{_vae_call.1} parent=1 // pred_region
      %746 = dma.done [#allocation3], 256
    $region77: #{_vae_call.1} parent=1 // pred_fallthru
      _
    // Predicated region
    $region78: #{_vae_call.1} parent=1 // pred_check
      _
    $region79: #{_vae_call.1} parent=1 // pred_check_branch
      %748 = sbr.rel (0) target = $region81
    $region80: #{_vae_call.1} parent=1 // pred_region
      %750 = dma.done [#allocation7], 256
    $region81: #{_vae_call.1} parent=1 // pred_fallthru
      _
    %751 = vsyncpa [#allocation3], 1
    %752 = vsyncpa [#allocation7], 1
    %753 = vsyncpa [#allocation4], 1

// kernel: _vae_call.1
$region0: #{_vae_call.1}
  #allocation0 [shape = 'u32[]', space=smem, size = 0x4, offset = 0x4, fixed_abs, tag = 'smem constant byte address 0x4 - core index']
  #allocation1 [shape = 'u32[72,128]{1,0:T(1,128)}', space=vmem, size = 0x9000, scoped, tag = 'internal scratch']
  %s0 = inlined_call_operand.vmem [shape: f32[2], index: 0, kind: input, shape index: {}]
  %s1 = inlined_call_operand.vmem [shape: f32[16,32], index: 1, kind: input, shape index: {}]
  %s2 = inlined_call_operand.vmem [shape: f32[16,8], index: 2, kind: input, shape index: {}]
  %s3 = inlined_call_operand.vmem [shape: bf16[32,256], index: 3, kind: input, shape index: {}]
  %s4 = inlined_call_operand.vmem [shape: f32[1,256], index: 4, kind: input, shape index: {}]
  %s5 = inlined_call_operand.vmem [shape: f32[1,256], index: 5, kind: input, shape index: {}]
  %s6 = inlined_call_operand.vmem [shape: f32[1,256], index: 6, kind: input, shape index: {}]
  %s7 = inlined_call_operand.vmem [shape: bf16[256,16], index: 7, kind: input, shape index: {}]
  %s8 = inlined_call_operand.vmem [shape: f32[1,16], index: 8, kind: input, shape index: {}]
  %s9 = inlined_call_operand.vmem [shape: bf16[8,256], index: 9, kind: input, shape index: {}]
  %s10 = inlined_call_operand.vmem [shape: f32[1,256], index: 10, kind: input, shape index: {}]
  %s11 = inlined_call_operand.vmem [shape: f32[1,256], index: 11, kind: input, shape index: {}]
  %s12 = inlined_call_operand.vmem [shape: f32[1,256], index: 12, kind: input, shape index: {}]
  %s13 = inlined_call_operand.vmem [shape: bf16[256,32], index: 13, kind: input, shape index: {}]
  %s14 = inlined_call_operand.vmem [shape: f32[1,32], index: 14, kind: input, shape index: {}]
  %s15 = inlined_call_operand.hbm [shape: f32[16,32], index: 15, kind: output, shape index: {0}]
  %s16 = inlined_call_operand.hbm [shape: f32[16,16], index: 16, kind: output, shape index: {1}]
  %17 = xla_tuple %s15, %s16
  %s18 = sld [smem:[#allocation0]]
  $region82: #{_vae_call.1} parent=0
    _
  %s20 = ssub.s32 1, %s18
  %s21 = scalar_select 0, %s20, %s18
  $region1: #{_vae_call.1} parent=0
    #allocation2 [shape = 'u8[512]{0}', space=smem, size = 0x200, scoped, tag = 'input window, operand 0, single buffered']
    #allocation3 [shape = 's32[1]{0}', space=sflag, size = 0x4, scoped, tag = 'scoped memory for _vae_call.1']
    #allocation4 [shape = 's32[1]{0}', space=sflag, size = 0x4, scoped, tag = 'scoped memory for _vae_call.1']
    #allocation5 [shape = 'u8[8192]{0}', space=vmem, size = 0x2000, scoped, tag = 'output window, operand 0, single buffered']
    #allocation6 [shape = 'u8[8192]{0}', space=vmem, size = 0x2000, scoped, tag = 'output window, operand 1, single buffered']
    #allocation7 [shape = 's32[1]{0}', space=sflag, size = 0x4, scoped, tag = 'scoped memory for _vae_call.1']
    %22 = vsyncpa [#allocation4], 0
    %23 = vsyncpa [#allocation3], 0
    %24 = vsyncpa [#allocation7], 0
    // Predicated region
    $region2: #{_vae_call.1} parent=1 // pred_check
      _
    $region3: #{_vae_call.1} parent=1 // pred_check_branch
      %26 = sbr.rel (0) target = $region5
    $region4: #{_vae_call.1} parent=1 // pred_region
      %28 = vsyncadd [#allocation4], 0
      %s30 = sshll.u32 %s0, 4
      %s31 = int_to_ptr.vmem [resolvable:$true] %s30
      %33 = dma.vmem_to_smem %s31, 16, [#allocation2], [#allocation4]
    $region5: #{_vae_call.1} parent=1 // pred_fallthru
      _
    // Predicated region
    $region6: #{_vae_call.1} parent=1 // pred_check
      _
    $region7: #{_vae_call.1} parent=1 // pred_check_branch
      %35 = sbr.rel (0) target = $region9
    $region8: #{_vae_call.1} parent=1 // pred_region
      _
    $region9: #{_vae_call.1} parent=1 // pred_fallthru
      _
    // Predicated region
    $region10: #{_vae_call.1} parent=1 // pred_check
      _
    $region11: #{_vae_call.1} parent=1 // pred_check_branch
      %37 = sbr.rel (0) target = $region13
    $region12: #{_vae_call.1} parent=1 // pred_region
      _
    $region13: #{_vae_call.1} parent=1 // pred_fallthru
      _
    // Predicated region
    $region14: #{_vae_call.1} parent=1 // pred_check
      _
    $region15: #{_vae_call.1} parent=1 // pred_check_branch
      %39 = sbr.rel (0) target = $region17
    $region16: #{_vae_call.1} parent=1 // pred_region
      _
    $region17: #{_vae_call.1} parent=1 // pred_fallthru
      _
    // Predicated region
    $region18: #{_vae_call.1} parent=1 // pred_check
      _
    $region19: #{_vae_call.1} parent=1 // pred_check_branch
      %41 = sbr.rel (0) target = $region21
    $region20: #{_vae_call.1} parent=1 // pred_region
      _
    $region21: #{_vae_call.1} parent=1 // pred_fallthru
      _
    // Predicated region
    $region22: #{_vae_call.1} parent=1 // pred_check
      _
    $region23: #{_vae_call.1} parent=1 // pred_check_branch
      %43 = sbr.rel (0) target = $region25
    $region24: #{_vae_call.1} parent=1 // pred_region
      _
    $region25: #{_vae_call.1} parent=1 // pred_fallthru
      _
    // Predicated region
    $region26: #{_vae_call.1} parent=1 // pred_check
      _
    $region27: #{_vae_call.1} parent=1 // pred_check_branch
      %45 = sbr.rel (0) target = $region29
    $region28: #{_vae_call.1} parent=1 // pred_region
      _
    $region29: #{_vae_call.1} parent=1 // pred_fallthru
      _
    // Predicated region
    $region30: #{_vae_call.1} parent=1 // pred_check
      _
    $region31: #{_vae_call.1} parent=1 // pred_check_branch
      %47 = sbr.rel (0) target = $region33
    $region32: #{_vae_call.1} parent=1 // pred_region
      _
    $region33: #{_vae_call.1} parent=1 // pred_fallthru
      _
    // Predicated region
    $region34: #{_vae_call.1} parent=1 // pred_check
      _
    $region35: #{_vae_call.1} parent=1 // pred_check_branch
      %49 = sbr.rel (0) target = $region37
    $region36: #{_vae_call.1} parent=1 // pred_region
      _
    $region37: #{_vae_call.1} parent=1 // pred_fallthru
      _
    // Predicated region
    $region38: #{_vae_call.1} parent=1 // pred_check
      _
    $region39: #{_vae_call.1} parent=1 // pred_check_branch
      %51 = sbr.rel (0) target = $region41
    $region40: #{_vae_call.1} parent=1 // pred_region
      _
    $region41: #{_vae_call.1} parent=1 // pred_fallthru
      _
    // Predicated region
    $region42: #{_vae_call.1} parent=1 // pred_check
      _
    $region43: #{_vae_call.1} parent=1 // pred_check_branch
      %53 = sbr.rel (0) target = $region45
    $region44: #{_vae_call.1} parent=1 // pred_region
      _
    $region45: #{_vae_call.1} parent=1 // pred_fallthru
      _
    // Predicated region
    $region46: #{_vae_call.1} parent=1 // pred_check
      _
    $region47: #{_vae_call.1} parent=1 // pred_check_branch
      %55 = sbr.rel (0) target = $region49
    $region48: #{_vae_call.1} parent=1 // pred_region
      _
    $region49: #{_vae_call.1} parent=1 // pred_fallthru
      _
    // Predicated region
    $region50: #{_vae_call.1} parent=1 // pred_check
      _
    $region51: #{_vae_call.1} parent=1 // pred_check_branch
      %57 = sbr.rel (0) target = $region53
    $region52: #{_vae_call.1} parent=1 // pred_region
      _
    $region53: #{_vae_call.1} parent=1 // pred_fallthru
      _
    // Predicated region
    $region54: #{_vae_call.1} parent=1 // pred_check
      _
    $region55: #{_vae_call.1} parent=1 // pred_check_branch
      %59 = sbr.rel (0) target = $region57
    $region56: #{_vae_call.1} parent=1 // pred_region
      _
    $region57: #{_vae_call.1} parent=1 // pred_fallthru
      _
    // Predicated region
    $region58: #{_vae_call.1} parent=1 // pred_check
      _
    $region59: #{_vae_call.1} parent=1 // pred_check_branch
      %61 = sbr.rel (0) target = $region61
    $region60: #{_vae_call.1} parent=1 // pred_region
      _
    $region61: #{_vae_call.1} parent=1 // pred_fallthru
      _
    // Predicated region
    $region62: #{_vae_call.1} parent=1 // pred_check
      _
    $region63: #{_vae_call.1} parent=1 // pred_check_branch
      %63 = sbr.rel (0) target = $region65
    $region64: #{_vae_call.1} parent=1 // pred_region
      %65 = dma.done [#allocation4], 16
    $region65: #{_vae_call.1} parent=1 // pred_fallthru
      _
    %66 = sfence
    %s68 = sld [smem:[#allocation2]]
    %s69 = sld [smem:[#allocation2 + $0x1]]
    %v70 = vld [vmem:[%s1] sm:$0xff]
    %v71 = vld [vmem:[%s1 + $0x8] sm:$0xff]
    %v72 = vpack.c.bf16 %v71, %v70
    %v73 = vld [vmem:[%s3] sm:$0xff]
    %v74 = vld [vmem:[%s3 + $0x8] sm:$0xff]
    %v75 = vld [vmem:[%s3 + $0x10] sm:$0xff]
    %v76 = vld [vmem:[%s3 + $0x18] sm:$0xff]
    %v77 = vld [vmem:[%s4] sm:$0x3]
    %v79 = vperm.slane %v77, 0
    %v80 = vperm.slane %v77, 1
    %v87 = vunpack.c.l.b16 %v73
    %v88 = vunpack.c.h.b16 %v73
    %v89 = vunpack.c.l.b16 %v74
    %v90 = vunpack.c.h.b16 %v74
    %v91 = vunpack.c.l.b16 %v75
    %v92 = vunpack.c.h.b16 %v75
    %v93 = vunpack.c.l.b16 %v76
    %v94 = vunpack.c.h.b16 %v76
    %v95 = vpack.c.b16 %v89, %v87
    %v96 = vpack.c.b16 %v90, %v88
    %v97 = vpack.c.b16 %v93, %v91
    %v98 = vpack.c.b16 %v94, %v92
    %vm103 = vcmask 261120
    %v105 = vsel %vm103, %v72, 0
    %107 = vmatpush.bf16.msra.mxu0 0
    %108 = vmatpush.bf16.msra.mxu0 0
    %109 = vmatpush.bf16.msra.mxu0 0
    %110 = vmatpush.bf16.msra.mxu0 0
    %111 = vmatpush.bf16.msra.mxu0 0
    %112 = vmatpush.bf16.msra.mxu0 0
    %113 = vmatpush.bf16.msra.mxu0 %v97
    %114 = vmatpush.bf16.msra.mxu0 %v95
    %115 = vmatmul.bf16.gmra.mxu0 %v105
    %v116 = vpop.f32.mrf.mxu0
    %v117 = vadd.f32 %v79, %v116
    %v118 = vpop.f32.mrf.mxu0
    %v119 = vadd.f32 %v79, %v118
    %120 = vdwg.mxu0
    %121 = vmatpush.bf16.msra.mxu0 0
    %122 = vmatpush.bf16.msra.mxu0 0
    %123 = vmatpush.bf16.msra.mxu0 0
    %124 = vmatpush.bf16.msra.mxu0 0
    %125 = vmatpush.bf16.msra.mxu0 0
    %126 = vmatpush.bf16.msra.mxu0 0
    %127 = vmatpush.bf16.msra.mxu0 %v98
    %128 = vmatpush.bf16.msra.mxu0 %v96
    %129 = vmatmul.bf16.gmra.mxu0 %v105
    %v130 = vpop.f32.mrf.mxu0
    %v131 = vadd.f32 %v80, %v130
    %v132 = vpop.f32.mrf.mxu0
    %v133 = vadd.f32 %v80, %v132
    %134 = vdwg.mxu0
    %v135 = vmax.f32 %v117, 0.0
    %v136 = vmax.f32 %v131, 0.0
    %v137 = vmax.f32 %v119, 0.0
    %v138 = vmax.f32 %v133, 0.0
    %v139 = vmin.f32 %v117, 0.0
    %v140 = vmin.f32 %v131, 0.0
    %v141 = vmin.f32 %v119, 0.0
    %v142 = vmin.f32 %v133, 0.0
    %v143 = vstv %s68
    %v144 = vmul.f32 %v143, %v139
    %v145 = vmul.f32 %v143, %v140
    %v146 = vmul.f32 %v143, %v141
    %v147 = vmul.f32 %v143, %v142
    %v148 = vadd.f32 %v135, %v144
    %v149 = vadd.f32 %v136, %v145
    %v150 = vadd.f32 %v137, %v146
    %v151 = vadd.f32 %v138, %v147
    %v152 = vld [vmem:[%s5] sm:$0x3]
    %v153 = vld [vmem:[%s6] sm:$0x3]
    %v154 = vadd.f32 %v148, %v149
    %155 = vadd.xlane.f32.xlu0 %v154
    %v156 = vpop.xlane.xlu0 %155
    %v157 = vadd.f32 %v150, %v151
    %158 = vadd.xlane.f32.xlu0 %v157
    %v159 = vpop.xlane.xlu0 %158
    %v160 = vrcp.pop 256.0
    %v161 = vmul.f32 256.0, %v160
    %v162 = vsub.f32 1.0, %v161
    %v163 = vmul.f32 %v160, %v162
    %v164 = vadd.f32 %v160, %v163
    %vm165 = vweird.f32 %v160
    %v166 = vsel %vm165, %v160, %v164
    %v167 = vmul.f32 %v156, %v166
    %v168 = vmul.f32 %v159, %v166
    %v169 = vsub.f32 %v148, %v167
    %v170 = vsub.f32 %v149, %v167
    %v171 = vsub.f32 %v150, %v168
    %v172 = vsub.f32 %v151, %v168
    %v173 = vmul.f32 %v169, %v169
    %v174 = vmul.f32 %v170, %v170
    %v175 = vmul.f32 %v171, %v171
    %v176 = vmul.f32 %v172, %v172
    %v177 = vadd.f32 %v173, %v174
    %178 = vadd.xlane.f32.xlu0 %v177
    %v179 = vpop.xlane.xlu0 %178
    %v180 = vadd.f32 %v175, %v176
    %181 = vadd.xlane.f32.xlu0 %v180
    %v182 = vpop.xlane.xlu0 %181
    %v183 = vmul.f32 %v179, %v166
    %v184 = vmul.f32 %v182, %v166
    %v185 = vadd.f32 %v183, 1e-12
    %v186 = vadd.f32 %v184, 1e-12
    %v187 = vrsqrt.pop %v185
    %v188 = vmul.f32 %v187, %v185
    %v189 = vmul.f32 %v188, %v187
    %v190 = vmul.f32 0.5, %v189
    %v191 = vsub.f32 1.5, %v190
    %v192 = vmul.f32 %v187, %v191
    %vm193 = vweird.f32 %v185
    %vm194 = vweird.f32 %v187
    %vm195 = vmor %vm193, %vm194
    %v196 = vsel %vm195, %v187, %v192
    %v197 = vrsqrt.pop %v186
    %v198 = vmul.f32 %v197, %v186
    %v199 = vmul.f32 %v198, %v197
    %v200 = vmul.f32 0.5, %v199
    %v201 = vsub.f32 1.5, %v200
    %v202 = vmul.f32 %v197, %v201
    %vm203 = vweird.f32 %v186
    %vm204 = vweird.f32 %v197
    %vm205 = vmor %vm203, %vm204
    %v206 = vsel %vm205, %v197, %v202
    %v207 = vmul.f32 %v169, %v196
    %v208 = vmul.f32 %v170, %v196
    %v209 = vmul.f32 %v171, %v206
    %v210 = vmul.f32 %v172, %v206
    %v212 = vperm.slane %v152, 0
    %v213 = vperm.slane %v152, 1
    %v216 = vmul.f32 %v207, %v212
    %v217 = vmul.f32 %v208, %v213
    %v218 = vmul.f32 %v209, %v212
    %v219 = vmul.f32 %v210, %v213
    %v221 = vperm.slane %v153, 0
    %v222 = vperm.slane %v153, 1
    %v225 = vadd.f32 %v216, %v221
    %v226 = vadd.f32 %v217, %v222
    %v227 = vadd.f32 %v218, %v221
    %v228 = vadd.f32 %v219, %v222
    %v229 = vpack.c.bf16 %v227, %v225
    %v230 = vpack.c.bf16 %v228, %v226
    %v231 = vld [vmem:[%s7] sm:$0xf]
    %v232 = vld [vmem:[%s7 + $0x4] sm:$0xf]
    %v233 = vld [vmem:[%s7 + $0x8] sm:$0xf]
    %v234 = vld [vmem:[%s7 + $0xc] sm:$0xf]
    %v235 = vld [vmem:[%s7 + $0x10] sm:$0xf]
    %v236 = vld [vmem:[%s7 + $0x14] sm:$0xf]
    %v237 = vld [vmem:[%s7 + $0x18] sm:$0xf]
    %v238 = vld [vmem:[%s7 + $0x1c] sm:$0xf]
    %v239 = vld [vmem:[%s7 + $0x20] sm:$0xf]
    %v240 = vld [vmem:[%s7 + $0x24] sm:$0xf]
    %v241 = vld [vmem:[%s7 + $0x28] sm:$0xf]
    %v242 = vld [vmem:[%s7 + $0x2c] sm:$0xf]
    %v243 = vld [vmem:[%s7 + $0x30] sm:$0xf]
    %v244 = vld [vmem:[%s7 + $0x34] sm:$0xf]
    %v245 = vld [vmem:[%s7 + $0x38] sm:$0xf]
    %v246 = vld [vmem:[%s7 + $0x3c] sm:$0xf]
    %v247 = vld [vmem:[%s7 + $0x40] sm:$0xf]
    %v248 = vld [vmem:[%s7 + $0x44] sm:$0xf]
    %v249 = vld [vmem:[%s7 + $0x48] sm:$0xf]
    %v250 = vld [vmem:[%s7 + $0x4c] sm:$0xf]
    %v251 = vld [vmem:[%s7 + $0x50] sm:$0xf]
    %v252 = vld [vmem:[%s7 + $0x54] sm:$0xf]
    %v253 = vld [vmem:[%s7 + $0x58] sm:$0xf]
    %v254 = vld [vmem:[%s7 + $0x5c] sm:$0xf]
    %v255 = vld [vmem:[%s7 + $0x60] sm:$0xf]
    %v256 = vld [vmem:[%s7 + $0x64] sm:$0xf]
    %v257 = vld [vmem:[%s7 + $0x68] sm:$0xf]
    %v258 = vld [vmem:[%s7 + $0x6c] sm:$0xf]
    %v259 = vld [vmem:[%s7 + $0x70] sm:$0xf]
    %v260 = vld [vmem:[%s7 + $0x74] sm:$0xf]
    %v261 = vld [vmem:[%s7 + $0x78] sm:$0xf]
    %v262 = vld [vmem:[%s7 + $0x7c] sm:$0xf]
    %v263 = vld [vmem:[%s8] sm:$0x1]
    %v265 = vperm.slane %v263, 0
    %v299 = vunpack.c.l.b16 %v231
    %v300 = vunpack.c.l.b16 %v232
    %v301 = vunpack.c.l.b16 %v233
    %v302 = vunpack.c.l.b16 %v234
    %v303 = vunpack.c.l.b16 %v235
    %v304 = vunpack.c.l.b16 %v236
    %v305 = vunpack.c.l.b16 %v237
    %v306 = vunpack.c.l.b16 %v238
    %v307 = vunpack.c.l.b16 %v239
    %v308 = vunpack.c.l.b16 %v240
    %v309 = vunpack.c.l.b16 %v241
    %v310 = vunpack.c.l.b16 %v242
    %v311 = vunpack.c.l.b16 %v243
    %v312 = vunpack.c.l.b16 %v244
    %v313 = vunpack.c.l.b16 %v245
    %v314 = vunpack.c.l.b16 %v246
    %v315 = vunpack.c.l.b16 %v247
    %v316 = vunpack.c.l.b16 %v248
    %v317 = vunpack.c.l.b16 %v249
    %v318 = vunpack.c.l.b16 %v250
    %v319 = vunpack.c.l.b16 %v251
    %v320 = vunpack.c.l.b16 %v252
    %v321 = vunpack.c.l.b16 %v253
    %v322 = vunpack.c.l.b16 %v254
    %v323 = vunpack.c.l.b16 %v255
    %v324 = vunpack.c.l.b16 %v256
    %v325 = vunpack.c.l.b16 %v257
    %v326 = vunpack.c.l.b16 %v258
    %v327 = vunpack.c.l.b16 %v259
    %v328 = vunpack.c.l.b16 %v260
    %v329 = vunpack.c.l.b16 %v261
    %v330 = vunpack.c.l.b16 %v262
    %v331 = vpack.c.b16 %v300, %v299
    %v332 = vpack.c.b16 %v302, %v301
    %v333 = vpack.c.b16 %v304, %v303
    %v334 = vpack.c.b16 %v306, %v305
    %v335 = vpack.c.b16 %v308, %v307
    %v336 = vpack.c.b16 %v310, %v309
    %v337 = vpack.c.b16 %v312, %v311
    %v338 = vpack.c.b16 %v314, %v313
    %v339 = vpack.c.b16 %v316, %v315
    %v340 = vpack.c.b16 %v318, %v317
    %v341 = vpack.c.b16 %v320, %v319
    %v342 = vpack.c.b16 %v322, %v321
    %v343 = vpack.c.b16 %v324, %v323
    %v344 = vpack.c.b16 %v326, %v325
    %v345 = vpack.c.b16 %v328, %v327
    %v346 = vpack.c.b16 %v330, %v329
    %363 = vmatpush.bf16.msra.mxu0 %v338
    %364 = vmatpush.bf16.msra.mxu0 %v337
    %365 = vmatpush.bf16.msra.mxu0 %v336
    %366 = vmatpush.bf16.msra.mxu0 %v335
    %367 = vmatpush.bf16.msra.mxu0 %v334
    %368 = vmatpush.bf16.msra.mxu0 %v333
    %369 = vmatpush.bf16.msra.mxu0 %v332
    %370 = vmatpush.bf16.msra.mxu0 %v331
    %371 = vmatmul.bf16.gmra.mxu0 %v229
    %v372 = vpop.f32.mrf.mxu0
    %v373 = vadd.f32 %v265, %v372
    %v374 = vpop.f32.mrf.mxu0
    %v375 = vadd.f32 %v265, %v374
    %376 = vdwg.mxu0
    %377 = vmatpush.bf16.msra.mxu0 %v346
    %378 = vmatpush.bf16.msra.mxu0 %v345
    %379 = vmatpush.bf16.msra.mxu0 %v344
    %380 = vmatpush.bf16.msra.mxu0 %v343
    %381 = vmatpush.bf16.msra.mxu0 %v342
    %382 = vmatpush.bf16.msra.mxu0 %v341
    %383 = vmatpush.bf16.msra.mxu0 %v340
    %384 = vmatpush.bf16.msra.mxu0 %v339
    %385 = vmatmul.bf16.gmra.mxu0 %v230
    %v386 = vpop.f32.mrf.mxu0
    %v387 = vadd.f32 %v373, %v386
    %v388 = vpop.f32.mrf.mxu0
    %v389 = vadd.f32 %v375, %v388
    %390 = vdwg.mxu0
    %v391 = vld [vmem:[%s2] sm:$0xff]
    %v392 = vld [vmem:[%s2 + $0x8] sm:$0xff]
    %v393 = vmul.f32 %v387, 0.5
    %v394 = vmul.f32 %v389, 0.5
    %v395 = vmul.f32 %v393, 1.442695
    %v396 = vpow.pop %v395
    %v397 = vmul.f32 %v394, 1.442695
    %v398 = vpow.pop %v397
    %401 = vrot.lane.b32.xlu0 %v396, 120
    %v402 = vpop.permute.xlu0 %401
    %403 = vrot.lane.b32.xlu0 %v398, 120
    %v404 = vpop.permute.xlu0 %403
    %v407 = vmul.f32 %v391, %v402
    %v408 = vmul.f32 %v392, %v404
    %v409 = vadd.f32 %v387, %v407
    %v410 = vadd.f32 %v389, %v408
    %v411 = vpack.c.bf16 %v410, %v409
    %v412 = vld [vmem:[%s9] sm:$0xff]
    %v413 = vld [vmem:[%s10] sm:$0x3]
    %v415 = vperm.slane %v413, 0
    %v416 = vperm.slane %v413, 1
    %v420 = vunpack.c.l.b16 %v412
    %v421 = vunpack.c.h.b16 %v412
    %v422 = vpack.c.b16 %v420, %v420
    %v423 = vpack.c.b16 %v421, %v421
    %vm424 = vcmask 64512
    %v426 = vsel %vm424, %v411, 0
    %vm428 = vcmask 1043456
    %v430 = vsel %vm428, %v422, 0
    %v433 = vsel %vm428, %v423, 0
    %435 = vmatpush.bf16.msra.mxu0 0
    %436 = vmatpush.bf16.msra.mxu0 0
    %437 = vmatpush.bf16.msra.mxu0 0
    %438 = vmatpush.bf16.msra.mxu0 0
    %439 = vmatpush.bf16.msra.mxu0 0
    %440 = vmatpush.bf16.msra.mxu0 0
    %441 = vmatpush.bf16.msra.mxu0 0
    %442 = vmatpush.bf16.msra.mxu0 %v430
    %443 = vmatmul.bf16.gmra.mxu0 %v426
    %v444 = vpop.f32.mrf.mxu0
    %v445 = vadd.f32 %v415, %v444
    %v446 = vpop.f32.mrf.mxu0
    %v447 = vadd.f32 %v415, %v446
    %448 = vdwg.mxu0
    %449 = vmatpush.bf16.msra.mxu0 0
    %450 = vmatpush.bf16.msra.mxu0 0
    %451 = vmatpush.bf16.msra.mxu0 0
    %452 = vmatpush.bf16.msra.mxu0 0
    %453 = vmatpush.bf16.msra.mxu0 0
    %454 = vmatpush.bf16.msra.mxu0 0
    %455 = vmatpush.bf16.msra.mxu0 0
    %456 = vmatpush.bf16.msra.mxu0 %v433
    %457 = vmatmul.bf16.gmra.mxu0 %v426
    %v458 = vpop.f32.mrf.mxu0
    %v459 = vadd.f32 %v416, %v458
    %v460 = vpop.f32.mrf.mxu0
    %v461 = vadd.f32 %v416, %v460
    %462 = vdwg.mxu0
    %v463 = vmax.f32 %v445, 0.0
    %v464 = vmax.f32 %v459, 0.0
    %v465 = vmax.f32 %v447, 0.0
    %v466 = vmax.f32 %v461, 0.0
    %v467 = vmin.f32 %v445, 0.0
    %v468 = vmin.f32 %v459, 0.0
    %v469 = vmin.f32 %v447, 0.0
    %v470 = vmin.f32 %v461, 0.0
    %v471 = vstv %s69
    %v472 = vmul.f32 %v471, %v467
    %v473 = vmul.f32 %v471, %v468
    %v474 = vmul.f32 %v471, %v469
    %v475 = vmul.f32 %v471, %v470
    %v476 = vadd.f32 %v463, %v472
    %v477 = vadd.f32 %v464, %v473
    %v478 = vadd.f32 %v465, %v474
    %v479 = vadd.f32 %v466, %v475
    %v480 = vld [vmem:[%s11] sm:$0x3]
    %v481 = vld [vmem:[%s12] sm:$0x3]
    %v482 = vadd.f32 %v476, %v477
    %483 = vadd.xlane.f32.xlu0 %v482
    %v484 = vpop.xlane.xlu0 %483
    %v485 = vadd.f32 %v478, %v479
    %486 = vadd.xlane.f32.xlu0 %v485
    %v487 = vpop.xlane.xlu0 %486
    %v488 = vmul.f32 %v484, %v166
    %v489 = vmul.f32 %v487, %v166
    %v490 = vsub.f32 %v476, %v488
    %v491 = vsub.f32 %v477, %v488
    %v492 = vsub.f32 %v478, %v489
    %v493 = vsub.f32 %v479, %v489
    %v494 = vmul.f32 %v490, %v490
    %v495 = vmul.f32 %v491, %v491
    %v496 = vmul.f32 %v492, %v492
    %v497 = vmul.f32 %v493, %v493
    %v498 = vadd.f32 %v494, %v495
    %499 = vadd.xlane.f32.xlu0 %v498
    %v500 = vpop.xlane.xlu0 %499
    %v501 = vadd.f32 %v496, %v497
    %502 = vadd.xlane.f32.xlu0 %v501
    %v503 = vpop.xlane.xlu0 %502
    %v504 = vmul.f32 %v500, %v166
    %v505 = vmul.f32 %v503, %v166
    %v506 = vadd.f32 %v504, 1e-12
    %v507 = vadd.f32 %v505, 1e-12
    %v508 = vrsqrt.pop %v506
    %v509 = vmul.f32 %v508, %v506
    %v510 = vmul.f32 %v509, %v508
    %v511 = vmul.f32 0.5, %v510
    %v512 = vsub.f32 1.5, %v511
    %v513 = vmul.f32 %v508, %v512
    %vm514 = vweird.f32 %v506
    %vm515 = vweird.f32 %v508
    %vm516 = vmor %vm514, %vm515
    %v517 = vsel %vm516, %v508, %v513
    %v518 = vrsqrt.pop %v507
    %v519 = vmul.f32 %v518, %v507
    %v520 = vmul.f32 %v519, %v518
    %v521 = vmul.f32 0.5, %v520
    %v522 = vsub.f32 1.5, %v521
    %v523 = vmul.f32 %v518, %v522
    %vm524 = vweird.f32 %v507
    %vm525 = vweird.f32 %v518
    %vm526 = vmor %vm524, %vm525
    %v527 = vsel %vm526, %v518, %v523
    %v528 = vmul.f32 %v490, %v517
    %v529 = vmul.f32 %v491, %v517
    %v530 = vmul.f32 %v492, %v527
    %v531 = vmul.f32 %v493, %v527
    %v533 = vperm.slane %v480, 0
    %v534 = vperm.slane %v480, 1
    %v537 = vmul.f32 %v528, %v533
    %v538 = vmul.f32 %v529, %v534
    %v539 = vmul.f32 %v530, %v533
    %v540 = vmul.f32 %v531, %v534
    %v542 = vperm.slane %v481, 0
    %v543 = vperm.slane %v481, 1
    %v546 = vadd.f32 %v537, %v542
    %v547 = vadd.f32 %v538, %v543
    %v548 = vadd.f32 %v539, %v542
    %v549 = vadd.f32 %v540, %v543
    %v550 = vpack.c.bf16 %v548, %v546
    %v551 = vpack.c.bf16 %v549, %v547
    %v552 = vld [vmem:[%s13] sm:$0xf]
    %v553 = vld [vmem:[%s13 + $0x4] sm:$0xf]
    %v554 = vld [vmem:[%s13 + $0x8] sm:$0xf]
    %v555 = vld [vmem:[%s13 + $0xc] sm:$0xf]
    %v556 = vld [vmem:[%s13 + $0x10] sm:$0xf]
    %v557 = vld [vmem:[%s13 + $0x14] sm:$0xf]
    %v558 = vld [vmem:[%s13 + $0x18] sm:$0xf]
    %v559 = vld [vmem:[%s13 + $0x1c] sm:$0xf]
    %v560 = vld [vmem:[%s13 + $0x20] sm:$0xf]
    %v561 = vld [vmem:[%s13 + $0x24] sm:$0xf]
    %v562 = vld [vmem:[%s13 + $0x28] sm:$0xf]
    %v563 = vld [vmem:[%s13 + $0x2c] sm:$0xf]
    %v564 = vld [vmem:[%s13 + $0x30] sm:$0xf]
    %v565 = vld [vmem:[%s13 + $0x34] sm:$0xf]
    %v566 = vld [vmem:[%s13 + $0x38] sm:$0xf]
    %v567 = vld [vmem:[%s13 + $0x3c] sm:$0xf]
    %v568 = vld [vmem:[%s13 + $0x40] sm:$0xf]
    %v569 = vld [vmem:[%s13 + $0x44] sm:$0xf]
    %v570 = vld [vmem:[%s13 + $0x48] sm:$0xf]
    %v571 = vld [vmem:[%s13 + $0x4c] sm:$0xf]
    %v572 = vld [vmem:[%s13 + $0x50] sm:$0xf]
    %v573 = vld [vmem:[%s13 + $0x54] sm:$0xf]
    %v574 = vld [vmem:[%s13 + $0x58] sm:$0xf]
    %v575 = vld [vmem:[%s13 + $0x5c] sm:$0xf]
    %v576 = vld [vmem:[%s13 + $0x60] sm:$0xf]
    %v577 = vld [vmem:[%s13 + $0x64] sm:$0xf]
    %v578 = vld [vmem:[%s13 + $0x68] sm:$0xf]
    %v579 = vld [vmem:[%s13 + $0x6c] sm:$0xf]
    %v580 = vld [vmem:[%s13 + $0x70] sm:$0xf]
    %v581 = vld [vmem:[%s13 + $0x74] sm:$0xf]
    %v582 = vld [vmem:[%s13 + $0x78] sm:$0xf]
    %v583 = vld [vmem:[%s13 + $0x7c] sm:$0xf]
    %v584 = vld [vmem:[%s14] sm:$0x1]
    %v586 = vperm.slane %v584, 0
    %v620 = vunpack.c.l.b16 %v552
    %v621 = vunpack.c.l.b16 %v553
    %v622 = vunpack.c.l.b16 %v554
    %v623 = vunpack.c.l.b16 %v555
    %v624 = vunpack.c.l.b16 %v556
    %v625 = vunpack.c.l.b16 %v557
    %v626 = vunpack.c.l.b16 %v558
    %v627 = vunpack.c.l.b16 %v559
    %v628 = vunpack.c.l.b16 %v560
    %v629 = vunpack.c.l.b16 %v561
    %v630 = vunpack.c.l.b16 %v562
    %v631 = vunpack.c.l.b16 %v563
    %v632 = vunpack.c.l.b16 %v564
    %v633 = vunpack.c.l.b16 %v565
    %v634 = vunpack.c.l.b16 %v566
    %v635 = vunpack.c.l.b16 %v567
    %v636 = vunpack.c.l.b16 %v568
    %v637 = vunpack.c.l.b16 %v569
    %v638 = vunpack.c.l.b16 %v570
    %v639 = vunpack.c.l.b16 %v571
    %v640 = vunpack.c.l.b16 %v572
    %v641 = vunpack.c.l.b16 %v573
    %v642 = vunpack.c.l.b16 %v574
    %v643 = vunpack.c.l.b16 %v575
    %v644 = vunpack.c.l.b16 %v576
    %v645 = vunpack.c.l.b16 %v577
    %v646 = vunpack.c.l.b16 %v578
    %v647 = vunpack.c.l.b16 %v579
    %v648 = vunpack.c.l.b16 %v580
    %v649 = vunpack.c.l.b16 %v581
    %v650 = vunpack.c.l.b16 %v582
    %v651 = vunpack.c.l.b16 %v583
    %v652 = vpack.c.b16 %v621, %v620
    %v653 = vpack.c.b16 %v623, %v622
    %v654 = vpack.c.b16 %v625, %v624
    %v655 = vpack.c.b16 %v627, %v626
    %v656 = vpack.c.b16 %v629, %v628
    %v657 = vpack.c.b16 %v631, %v630
    %v658 = vpack.c.b16 %v633, %v632
    %v659 = vpack.c.b16 %v635, %v634
    %v660 = vpack.c.b16 %v637, %v636
    %v661 = vpack.c.b16 %v639, %v638
    %v662 = vpack.c.b16 %v641, %v640
    %v663 = vpack.c.b16 %v643, %v642
    %v664 = vpack.c.b16 %v645, %v644
    %v665 = vpack.c.b16 %v647, %v646
    %v666 = vpack.c.b16 %v649, %v648
    %v667 = vpack.c.b16 %v651, %v650
    %684 = vmatpush.bf16.msra.mxu0 %v659
    %685 = vmatpush.bf16.msra.mxu0 %v658
    %686 = vmatpush.bf16.msra.mxu0 %v657
    %687 = vmatpush.bf16.msra.mxu0 %v656
    %688 = vmatpush.bf16.msra.mxu0 %v655
    %689 = vmatpush.bf16.msra.mxu0 %v654
    %690 = vmatpush.bf16.msra.mxu0 %v653
    %691 = vmatpush.bf16.msra.mxu0 %v652
    %692 = vmatmul.bf16.gmra.mxu0 %v550
    %v693 = vpop.f32.mrf.mxu0
    %v694 = vadd.f32 %v586, %v693
    %v695 = vpop.f32.mrf.mxu0
    %v696 = vadd.f32 %v586, %v695
    %697 = vdwg.mxu0
    %698 = vmatpush.bf16.msra.mxu0 %v667
    %699 = vmatpush.bf16.msra.mxu0 %v666
    %700 = vmatpush.bf16.msra.mxu0 %v665
    %701 = vmatpush.bf16.msra.mxu0 %v664
    %702 = vmatpush.bf16.msra.mxu0 %v663
    %703 = vmatpush.bf16.msra.mxu0 %v662
    %704 = vmatpush.bf16.msra.mxu0 %v661
    %705 = vmatpush.bf16.msra.mxu0 %v660
    %706 = vmatmul.bf16.gmra.mxu0 %v551
    %v707 = vpop.f32.mrf.mxu0
    %v708 = vadd.f32 %v694, %v707
    %v709 = vpop.f32.mrf.mxu0
    %v710 = vadd.f32 %v696, %v709
    %711 = vdwg.mxu0
    %712 = vst.msk [vmem:[#allocation5] sm:$0xff] %vm103, %v708
    %713 = vst.msk [vmem:[#allocation5 + $0x8] sm:$0xff] %vm103, %v710
    %vm714 = vcmask 130048
    %715 = vst.msk [vmem:[#allocation6] sm:$0xff] %vm714, %v387
    %716 = vst.msk [vmem:[#allocation6 + $0x8] sm:$0xff] %vm714, %v389
    // Predicated region
    $region66: #{_vae_call.1} parent=1 // pred_check
      _
    $region67: #{_vae_call.1} parent=1 // pred_check_branch
      %718 = sbr.rel (0) target = $region69
    $region68: #{_vae_call.1} parent=1 // pred_region
      %720 = vsyncadd [#allocation3], 0
      %s721 = sshll.u32 [#allocation5], 4
      %s722 = int_to_ptr.vmem [resolvable:$true] %s721
      %s723 = sshll.u32 %s15, 4
      %s724 = int_to_ptr.hbm [resolvable:$true] %s723
      %729 = dma.vmem_to_hbm [thread:$0]  %s722, 256, %s724, [#allocation3], 128, 128, 8
    $region69: #{_vae_call.1} parent=1 // pred_fallthru
      _
    // Predicated region
    $region70: #{_vae_call.1} parent=1 // pred_check
      _
    $region71: #{_vae_call.1} parent=1 // pred_check_branch
      %731 = sbr.rel (0) target = $region73
    $region72: #{_vae_call.1} parent=1 // pred_region
      %733 = vsyncadd [#allocation7], 0
      %s734 = sshll.u32 [#allocation6], 4
      %s735 = int_to_ptr.vmem [resolvable:$true] %s734
      %s736 = sshll.u32 %s16, 4
      %s737 = int_to_ptr.hbm [resolvable:$true] %s736
      %742 = dma.vmem_to_hbm [thread:$0]  %s735, 256, %s737, [#allocation7], 128, 128, 8
    $region73: #{_vae_call.1} parent=1 // pred_fallthru
      _
    // Predicated region
    $region74: #{_vae_call.1} parent=1 // pred_check
      _
    $region75: #{_vae_call.1} parent=1 // pred_check_branch
      %744 = sbr.rel (0) target = $region77
    $region76: #{_vae_call.1} parent=1 // pred_region
      %746 = dma.done [#allocation3], 256
    $region77: #{_vae_call.1} parent=1 // pred_fallthru
      _
    // Predicated region
    $region78: #{_vae_call.1} parent=1 // pred_check
      _
    $region79: #{_vae_call.1} parent=1 // pred_check_branch
      %748 = sbr.rel (0) target = $region81
    $region80: #{_vae_call.1} parent=1 // pred_region
      %750 = dma.done [#allocation7], 256
    $region81: #{_vae_call.1} parent=1 // pred_fallthru
      _
    %751 = vsyncpa [#allocation3], 1
    %752 = vsyncpa [#allocation7], 1
    %753 = vsyncpa [#allocation4], 1

</llo_original>
